<compile_context>
chip_gen: v5e
topology: v5e:2x2
jax: 0.10.0
libtpu: 0.0.40
codegen_flags: <defaults>
</compile_context>

<pallas_src>
import functools
import math

import jax
import jax.numpy as jnp
from jax.experimental import pallas as pl
from jax.experimental.pallas import tpu as pltpu


_SQRT_HALF = 1.0 / math.sqrt(2.0)


def _erf_approx(x):
    """Abramowitz & Stegun 7.1.26 erf approximation (max abs err ~1.5e-7).

    Built only from exp / abs / select so it lowers on every TPU generation
    (does not rely on a native erf lowering inside the kernel)."""
    a1, a2, a3, a4, a5 = (0.254829592, -0.284496736, 1.421413741,
                          -1.453152027, 1.061405429)
    p = 0.3275911
    z = jnp.abs(x)
    t = 1.0 / (1.0 + p * z)
    poly = ((((a5 * t + a4) * t + a3) * t + a2) * t + a1) * t
    y = 1.0 - poly * jnp.exp(-z * z)
    return jnp.where(x < 0.0, -y, y)


def _gelu_exact(x):
    # PyTorch nn.GELU default (approximate='none'): 0.5*x*(1+erf(x/sqrt(2)))
    return 0.5 * x * (1.0 + _erf_approx(x * _SQRT_HALF))


def cbam_kernel(x_ref, w1t_ref, b1_ref, w2t_ref, b2_ref, wm_ref, bn_ref,
                o_ref, *, C, H, W, K, Bt):
    HW = H * W
    pad = (K - 1) // 2
    pad_flat = pad * W + pad          # flat-axis zero padding covering kh & kw
    R = 2 * Bt

    x = x_ref[...]                                        # (Bt, C, HW) f32

    # ---------------- ChannelGate (whole batch block at once) ----------------
    max_hw = jnp.max(x, axis=2)                           # (Bt, C)
    avg_hw = jnp.sum(x, axis=2) * (1.0 / HW)              # (Bt, C)
    pooled = jnp.concatenate([avg_hw, max_hw], axis=0)    # (2*Bt, C)

    # Shared MLP fused into ONE pair of small matmuls for all 2*Bt pooled rows.
    hid = jnp.dot(pooled, w1t_ref[...],
                  preferred_element_type=jnp.float32) + b1_ref[...]
    hid = _gelu_exact(hid)                                # (2*Bt, Cr)
    att2 = jnp.dot(hid, w2t_ref[...],
                   preferred_element_type=jnp.float32) + b2_ref[...]
    att = att2[0:Bt, :] + att2[Bt:R, :]                   # avg-path + max-path
    c_scale = jax.nn.sigmoid(att)                         # (Bt, C)

    x_cg = x * c_scale[:, :, None]                        # (Bt, C, HW)

    # ---------------- SpatialGate ----------------
    # ChannelPool for all Bt elements, stacked into one sublane-dense slab:
    # rows [0:Bt) = channel-max maps, rows [Bt:2Bt) = channel-mean maps.
    cmax = jnp.max(x_cg, axis=1)                          # (Bt, HW)
    cmean = jnp.sum(x_cg, axis=1) * (1.0 / C)             # (Bt, HW)
    slab = jnp.concatenate([cmax, cmean], axis=0)         # (R, HW)

    # 7x7 conv (padding=3, stride 1, no bias) in the flat row-major layout.
    # Row validity is handled by the flat zero padding (pad_flat covers every
    # kh/kw shift); the conv weight and the column-wrap validity mask are
    # pre-folded into wm_ref (K*K, R, HW) in the wrapper, so the inner loop is
    # a pure vector FMA.  kh-outer keeps at most one shifted operand live.
    zpad = jnp.zeros((R, pad_flat), jnp.float32)
    padded = jnp.concatenate([zpad, slab, zpad], axis=1)  # (R, HW + 2*pad_flat)

    acc = jnp.zeros((R, HW), jnp.float32)
    for kh in range(K):
        sh = padded[:, kh * W: kh * W + HW + 2 * pad]     # (R, HW + 2*pad)
        for kw in range(K):
            acc = acc + sh[:, kw:kw + HW] * wm_ref[kh * K + kw]
    conv = acc[0:Bt, :] + acc[Bt:R, :]                    # (Bt, HW) max+mean taps

    # BatchNorm2d(1) folded into scale/shift (eval mode, running stats).
    # TODO(synk): PyTorch default train-mode BatchNorm (batch statistics +
    # running-stat update) is not reproduced.
    s_scale = jax.nn.sigmoid(conv * bn_ref[0] + bn_ref[1])   # (Bt, HW)

    o_ref[...] = x_cg * s_scale[:, None, :]               # (Bt, C, HW)


def _pick_block_b(B, C, HW, K, itemsize=4,
                  vmem_budget_bytes=24 << 20, min_split_bytes=512 << 10):
    """Per-grid-step batch block.

    * Largest divisor of B whose double-buffered in + out + folded-conv-weight
      footprint fits a budget that is safe on every generation (v7x: 64 MiB
      physical / 32 MiB scoped default; v5e/v6e: 128 MiB physical).
    * Only split into >= 2 grid steps (pipelining / v7x's two TensorCores) when
      each block still carries >= min_split_bytes of streamed data; tiny
      problems run as a single step to avoid the ~0.35us fixed per-step cost
      (single-TC v5e/v6e gain nothing from splitting small blocks).
    """
    per_b = itemsize * HW * (4 * C + 4 * K * K)   # 2x(in)+2x(out)+2x(wm) per b
    max_bt = max(1, vmem_budget_bytes // per_b)
    best = 1
    for d in range(1, B + 1):
        if B % d == 0 and d <= max_bt:
            best = d
    if best == B and B % 2 == 0 and (B // 2) * C * HW * itemsize >= min_split_bytes:
        best = B // 2
    return best


def cbam_forward(x, params):
    B, C, H, W = x.shape
    Cr = params["w1"].shape[0]
    K = params["wsp"].shape[-1]
    pad = (K - 1) // 2
    HW = H * W
    eps = 1e-5

    Bt = _pick_block_b(B, C, HW, K)
    R = 2 * Bt
    grid = (B // Bt,)

    # ---- trace-time glue: fold params into kernel-friendly operands ----
    # Eval-mode BatchNorm folded into scale/shift scalars (SMEM).
    bn_scale = params["bn_gamma"] / jnp.sqrt(params["bn_var"] + eps)
    bn_shift = params["bn_beta"] - params["bn_mean"] * bn_scale
    bn = jnp.stack([jnp.asarray(bn_scale, jnp.float32),
                    jnp.asarray(bn_shift, jnp.float32)]).reshape(2)

    # MLP weights transposed so the kernel computes (2Bt,C)@(C,Cr), (2Bt,Cr)@(Cr,C).
    w1t = params["w1"].astype(jnp.float32).T              # (C, Cr)
    w2t = params["w2"].astype(jnp.float32).T              # (Cr, C)
    b1 = params["b1"].reshape(1, Cr).astype(jnp.float32)
    b2 = params["b2"].reshape(1, C).astype(jnp.float32)

    # Pre-fold conv weight * column-validity mask per tap -> (K*K, R, HW).
    # Output column w of tap (kh, kw) reads source column w + kw - pad which
    # must stay inside [0, W) (no wrap across image rows).  Rows [0:Bt) act on
    # the channel-max map, rows [Bt:R) on the channel-mean map (ChannelPool
    # order: max first, mean second), matching the slab built in the kernel.
    cols = jnp.arange(HW, dtype=jnp.int32) % W
    col_ok = jnp.stack(
        [((cols + (kw - pad) >= 0) & (cols + (kw - pad) < W)).astype(jnp.float32)
         for kw in range(K)], axis=0)                     # (K, HW)
    wsp = params["wsp"].astype(jnp.float32).reshape(2, K * K)   # [ci, kh*K+kw]
    w_rows = jnp.concatenate(
        [jnp.broadcast_to(wsp[0][:, None], (K * K, Bt)),
         jnp.broadcast_to(wsp[1][:, None], (K * K, Bt))], axis=1)   # (K*K, R)
    wm = w_rows[:, :, None] * jnp.tile(col_ok, (K, 1))[:, None, :]  # (K*K, R, HW)

    # Lane-dense layout: (B, C, H*W); reshape outside the kernel is free.
    x_flat = x.reshape(B, C, HW).astype(jnp.float32)

    kernel = functools.partial(cbam_kernel, C=C, H=H, W=W, K=K, Bt=Bt)

    out_flat = pl.pallas_call(
        kernel,
        out_shape=jax.ShapeDtypeStruct((B, C, HW), jnp.float32),
        grid=grid,
        in_specs=[
            pl.BlockSpec((Bt, C, HW), lambda i: (i, 0, 0)),
            pl.BlockSpec((C, Cr), lambda i: (0, 0)),
            pl.BlockSpec((1, Cr), lambda i: (0, 0)),
            pl.BlockSpec((Cr, C), lambda i: (0, 0)),
            pl.BlockSpec((1, C), lambda i: (0, 0)),
            pl.BlockSpec((K * K, R, HW), lambda i: (0, 0, 0)),
            pl.BlockSpec(memory_space=pltpu.MemorySpace.SMEM),
        ],
        out_specs=pl.BlockSpec((Bt, C, HW), lambda i: (i, 0, 0)),
        compiler_params=pltpu.CompilerParams(
            dimension_semantics=("parallel",),
            vmem_limit_bytes=32 * 1024 * 1024),
    )(x_flat, w1t, b1, w2t, b2, wm, bn)

    return out_flat.reshape(B, C, H, W)


def cbam_reference(x, params):
    """Pure-JAX reference of CBAMModule.forward (eval-mode BatchNorm)."""
    eps = 1e-5
    avg = jnp.mean(x, axis=(2, 3))  # (B, C)
    mx = jnp.max(x, axis=(2, 3))    # (B, C)

    def mlp(p):
        h = p @ params["w1"].T + params["b1"]
        h = 0.5 * h * (1.0 + jax.lax.erf(h / jnp.sqrt(2.0)))
        return h @ params["w2"].T + params["b2"]

    att = mlp(avg) + mlp(mx)
    xc = x * jax.nn.sigmoid(att)[:, :, None, None]
    comp = jnp.concatenate([jnp.max(xc, axis=1, keepdims=True),
                            jnp.mean(xc, axis=1, keepdims=True)], axis=1)
    conv = jax.lax.conv_general_dilated(
        comp, params["wsp"], window_strides=(1, 1), padding=[(3, 3), (3, 3)],
        dimension_numbers=("NCHW", "OIHW", "NCHW"))
    bn_scale = params["bn_gamma"] / jnp.sqrt(params["bn_var"] + eps)
    bn_shift = params["bn_beta"] - params["bn_mean"] * bn_scale
    bn = conv * bn_scale + bn_shift
    return xc * jax.nn.sigmoid(bn)


if __name__ == "__main__":
    B, C, H, W = 2, 16, 16, 16
    reduction_ratio = 4
    Cr = C // reduction_ratio
    K = 7

    key = jax.random.PRNGKey(0)
    kx, k1, k2, k3, k4, k5 = jax.random.split(key, 6)
    x = jax.random.normal(kx, (B, C, H, W), jnp.float32)
    params = {
        "w1": jax.random.normal(k1, (Cr, C), jnp.float32) * 0.2,   # Linear(C, C//4)
        "b1": jax.random.normal(k2, (Cr,), jnp.float32) * 0.1,
        "w2": jax.random.normal(k3, (C, Cr), jnp.float32) * 0.2,   # Linear(C//4, C)
        "b2": jax.random.normal(k4, (C,), jnp.float32) * 0.1,
        "wsp": jax.random.normal(k5, (1, 2, K, K), jnp.float32) * 0.1,  # Conv2d(2,1,7)
        "bn_gamma": jnp.float32(1.0),   # PyTorch BatchNorm2d(1) defaults
        "bn_beta": jnp.float32(0.0),
        "bn_mean": jnp.float32(0.0),
        "bn_var": jnp.float32(1.0),
    }

    out = jax.block_until_ready(cbam_forward(x, params))
    ref = cbam_reference(x, params)

    assert out.shape == (B, C, H, W)
    if not jnp.allclose(out, ref, atol=2e-3, rtol=2e-3):
        raise AssertionError(
            "mismatch vs reference: max abs diff = %e"
            % float(jnp.max(jnp.abs(out - ref))))
    print("KERNEL_OK")
</pallas_src>

<mosaic_0001>
module attributes {stable_mosaic.version = 11 : i64} {
  func.func @cbam_kernel(%arg0: i32, %arg1: memref<2x16x256xf32, #tpu.memory_space<vmem>>, %arg2: memref<16x4xf32, #tpu.memory_space<vmem>>, %arg3: memref<1x4xf32, #tpu.memory_space<vmem>>, %arg4: memref<4x16xf32, #tpu.memory_space<vmem>>, %arg5: memref<1x16xf32, #tpu.memory_space<vmem>>, %arg6: memref<49x4x256xf32, #tpu.memory_space<vmem>>, %arg7: memref<2xf32, #tpu.memory_space<smem>>, %arg8: memref<2x16x256xf32, #tpu.memory_space<vmem>>) attributes {dimension_semantics = [#tpu.dimension_semantics<parallel>], iteration_bounds = array<i64: 1>, scalar_prefetch = 0 : i64, scratch_operands = 0 : i64, tpu.core_type = #tpu.core_type<tc>, window_params = [{transform_indices = @transform_0, window_bounds = array<i64: 2, 16, 256>}, {pipeline_mode = #tpu.pipeline_mode<synchronous>, transform_indices = @transform_1, window_bounds = array<i64: 16, 4>}, {pipeline_mode = #tpu.pipeline_mode<synchronous>, transform_indices = @transform_2, window_bounds = array<i64: 1, 4>}, {pipeline_mode = #tpu.pipeline_mode<synchronous>, transform_indices = @transform_3, window_bounds = array<i64: 4, 16>}, {pipeline_mode = #tpu.pipeline_mode<synchronous>, transform_indices = @transform_4, window_bounds = array<i64: 1, 16>}, {pipeline_mode = #tpu.pipeline_mode<synchronous>, transform_indices = @transform_5, window_bounds = array<i64: 49, 4, 256>}, {transform_indices = @transform_6, window_bounds = array<i64: 2>}, {transform_indices = @transform_7, window_bounds = array<i64: 2, 16, 256>}]} {
    %c0 = arith.constant 0 : index
    %c0_0 = arith.constant 0 : index
    %c0_1 = arith.constant 0 : index
    %0 = vector.load %arg1[%c0, %c0_0, %c0_1] : memref<2x16x256xf32, #tpu.memory_space<vmem>>, vector<2x16x256xf32>
    %cst = arith.constant dense<0xFF800000> : vector<2x16xf32>
    %1 = vector.multi_reduction <maximumf>, %0, %cst [2] : vector<2x16x256xf32> to vector<2x16xf32>
    %cst_2 = arith.constant dense<0.000000e+00> : vector<2x16xf32>
    %2 = vector.multi_reduction <add>, %0, %cst_2 [2] : vector<2x16x256xf32> to vector<2x16xf32>
    %cst_3 = arith.constant 3.906250e-03 : f32
    %3 = vector.broadcast %cst_3 : f32 to vector<2x16xf32>
    %4 = arith.mulf %2, %3 : vector<2x16xf32>
    %5 = tpu.concatenate %4, %1 in 0 : vector<2x16xf32>, vector<2x16xf32> -> vector<4x16xf32>
    %c0_4 = arith.constant 0 : index
    %c0_5 = arith.constant 0 : index
    %6 = vector.load %arg2[%c0_4, %c0_5] : memref<16x4xf32, #tpu.memory_space<vmem>>, vector<16x4xf32>
    %cst_6 = arith.constant dense<0.000000e+00> : vector<4x4xf32>
    %7 = tpu.matmul %5, %6, %cst_6 {dimension_numbers = #tpu.dot_dimension_numbers<[1], [0], [0], [1], [0, 0, 1, 1], [], []>} : vector<4x16xf32>, vector<16x4xf32>, vector<4x4xf32> -> vector<4x4xf32>
    %c0_7 = arith.constant 0 : index
    %c0_8 = arith.constant 0 : index
    %8 = vector.load %arg3[%c0_7, %c0_8] : memref<1x4xf32, #tpu.memory_space<vmem>>, vector<1x4xf32>
    %9 = vector.broadcast %8 : vector<1x4xf32> to vector<4x4xf32>
    %10 = arith.addf %7, %9 : vector<4x4xf32>
    %cst_9 = arith.constant 5.000000e-01 : f32
    %11 = vector.broadcast %cst_9 : f32 to vector<4x4xf32>
    %12 = arith.mulf %11, %10 : vector<4x4xf32>
    %cst_10 = arith.constant 0.707106769 : f32
    %13 = vector.broadcast %cst_10 : f32 to vector<4x4xf32>
    %14 = arith.mulf %10, %13 : vector<4x4xf32>
    %15 = math.absf %14 : vector<4x4xf32>
    %cst_11 = arith.constant 0.327591091 : f32
    %16 = vector.broadcast %cst_11 : f32 to vector<4x4xf32>
    %17 = arith.mulf %16, %15 : vector<4x4xf32>
    %cst_12 = arith.constant 1.000000e+00 : f32
    %18 = vector.broadcast %cst_12 : f32 to vector<4x4xf32>
    %19 = arith.addf %18, %17 : vector<4x4xf32>
    %cst_13 = arith.constant 1.000000e+00 : f32
    %20 = vector.broadcast %cst_13 : f32 to vector<4x4xf32>
    %21 = arith.divf %20, %19 : vector<4x4xf32>
    %cst_14 = arith.constant 1.06140542 : f32
    %22 = vector.broadcast %cst_14 : f32 to vector<4x4xf32>
    %23 = arith.mulf %22, %21 : vector<4x4xf32>
    %cst_15 = arith.constant -1.45315206 : f32
    %24 = vector.broadcast %cst_15 : f32 to vector<4x4xf32>
    %25 = arith.addf %23, %24 : vector<4x4xf32>
    %26 = arith.mulf %25, %21 : vector<4x4xf32>
    %cst_16 = arith.constant 1.42141378 : f32
    %27 = vector.broadcast %cst_16 : f32 to vector<4x4xf32>
    %28 = arith.addf %26, %27 : vector<4x4xf32>
    %29 = arith.mulf %28, %21 : vector<4x4xf32>
    %cst_17 = arith.constant -0.284496725 : f32
    %30 = vector.broadcast %cst_17 : f32 to vector<4x4xf32>
    %31 = arith.addf %29, %30 : vector<4x4xf32>
    %32 = arith.mulf %31, %21 : vector<4x4xf32>
    %cst_18 = arith.constant 0.254829586 : f32
    %33 = vector.broadcast %cst_18 : f32 to vector<4x4xf32>
    %34 = arith.addf %32, %33 : vector<4x4xf32>
    %35 = arith.mulf %34, %21 : vector<4x4xf32>
    %cst_19 = arith.constant 0.000000e+00 : f32
    %36 = vector.broadcast %cst_19 : f32 to vector<4x4xf32>
    %37 = arith.subf %36, %15 : vector<4x4xf32>
    %38 = arith.mulf %37, %15 : vector<4x4xf32>
    %39 = math.exp %38 : vector<4x4xf32>
    %40 = arith.mulf %35, %39 : vector<4x4xf32>
    %cst_20 = arith.constant 1.000000e+00 : f32
    %41 = vector.broadcast %cst_20 : f32 to vector<4x4xf32>
    %42 = arith.subf %41, %40 : vector<4x4xf32>
    %cst_21 = arith.constant 0.000000e+00 : f32
    %43 = vector.broadcast %cst_21 : f32 to vector<4x4xf32>
    %44 = arith.cmpf olt, %14, %43 : vector<4x4xf32>
    %cst_22 = arith.constant 0.000000e+00 : f32
    %45 = vector.broadcast %cst_22 : f32 to vector<4x4xf32>
    %46 = arith.subf %45, %42 : vector<4x4xf32>
    %47 = arith.select %44, %46, %42 : vector<4x4xi1>, vector<4x4xf32>
    %cst_23 = arith.constant 1.000000e+00 : f32
    %48 = vector.broadcast %cst_23 : f32 to vector<4x4xf32>
    %49 = arith.addf %48, %47 : vector<4x4xf32>
    %50 = arith.mulf %12, %49 : vector<4x4xf32>
    %c0_24 = arith.constant 0 : index
    %c0_25 = arith.constant 0 : index
    %51 = vector.load %arg4[%c0_24, %c0_25] : memref<4x16xf32, #tpu.memory_space<vmem>>, vector<4x16xf32>
    %cst_26 = arith.constant dense<0.000000e+00> : vector<4x16xf32>
    %52 = tpu.matmul %50, %51, %cst_26 {dimension_numbers = #tpu.dot_dimension_numbers<[1], [0], [0], [1], [0, 0, 1, 1], [], []>} : vector<4x4xf32>, vector<4x16xf32>, vector<4x16xf32> -> vector<4x16xf32>
    %c0_27 = arith.constant 0 : index
    %c0_28 = arith.constant 0 : index
    %53 = vector.load %arg5[%c0_27, %c0_28] : memref<1x16xf32, #tpu.memory_space<vmem>>, vector<1x16xf32>
    %54 = vector.broadcast %53 : vector<1x16xf32> to vector<4x16xf32>
    %55 = arith.addf %52, %54 : vector<4x16xf32>
    %56 = vector.extract_strided_slice %55 {offsets = [0, 0], sizes = [2, 16], strides = [1, 1]} : vector<4x16xf32> to vector<2x16xf32>
    %57 = vector.extract_strided_slice %55 {offsets = [2, 0], sizes = [2, 16], strides = [1, 1]} : vector<4x16xf32> to vector<2x16xf32>
    %58 = arith.addf %56, %57 : vector<2x16xf32>
    %59 = arith.negf %58 : vector<2x16xf32>
    %60 = math.exp %59 : vector<2x16xf32>
    %cst_29 = arith.constant 1.000000e+00 : f32
    %61 = vector.broadcast %cst_29 : f32 to vector<2x16xf32>
    %62 = arith.addf %61, %60 : vector<2x16xf32>
    %63 = arith.divf %61, %62 : vector<2x16xf32>
    %64 = vector.shape_cast %63 : vector<2x16xf32> to vector<2x16x1xf32>
    %65 = vector.broadcast %64 : vector<2x16x1xf32> to vector<2x16x256xf32>
    %66 = arith.mulf %0, %65 : vector<2x16x256xf32>
    %cst_30 = arith.constant dense<0xFF800000> : vector<2x256xf32>
    %67 = vector.multi_reduction <maximumf>, %66, %cst_30 [1] : vector<2x16x256xf32> to vector<2x256xf32>
    %cst_31 = arith.constant dense<0.000000e+00> : vector<2x256xf32>
    %68 = vector.multi_reduction <add>, %66, %cst_31 [1] : vector<2x16x256xf32> to vector<2x256xf32>
    %cst_32 = arith.constant 6.250000e-02 : f32
    %69 = vector.broadcast %cst_32 : f32 to vector<2x256xf32>
    %70 = arith.mulf %68, %69 : vector<2x256xf32>
    %71 = tpu.concatenate %67, %70 in 0 : vector<2x256xf32>, vector<2x256xf32> -> vector<4x256xf32>
    %cst_33 = arith.constant 0.000000e+00 : f32
    %72 = vector.broadcast %cst_33 : f32 to vector<4x51xf32>
    %73 = tpu.concatenate %72, %71, %72 in 1 : vector<4x51xf32>, vector<4x256xf32>, vector<4x51xf32> -> vector<4x358xf32>
    %cst_34 = arith.constant 0.000000e+00 : f32
    %74 = vector.broadcast %cst_34 : f32 to vector<4x256xf32>
    %75 = vector.extract_strided_slice %73 {offsets = [0, 0], sizes = [4, 262], strides = [1, 1]} : vector<4x358xf32> to vector<4x262xf32>
    %76 = vector.extract_strided_slice %75 {offsets = [0, 0], sizes = [4, 256], strides = [1, 1]} : vector<4x262xf32> to vector<4x256xf32>
    %c0_35 = arith.constant 0 : index
    %c0_36 = arith.constant 0 : index
    %c0_37 = arith.constant 0 : index
    %77 = vector.load %arg6[%c0_35, %c0_36, %c0_37] : memref<49x4x256xf32, #tpu.memory_space<vmem>>, vector<1x4x256xf32>
    %78 = vector.shape_cast %77 : vector<1x4x256xf32> to vector<4x256xf32>
    %79 = arith.mulf %76, %78 : vector<4x256xf32>
    %80 = arith.addf %74, %79 : vector<4x256xf32>
    %81 = vector.extract_strided_slice %75 {offsets = [0, 1], sizes = [4, 256], strides = [1, 1]} : vector<4x262xf32> to vector<4x256xf32>
    %c1 = arith.constant 1 : index
    %c0_38 = arith.constant 0 : index
    %c0_39 = arith.constant 0 : index
    %82 = vector.load %arg6[%c1, %c0_38, %c0_39] : memref<49x4x256xf32, #tpu.memory_space<vmem>>, vector<1x4x256xf32>
    %83 = vector.shape_cast %82 : vector<1x4x256xf32> to vector<4x256xf32>
    %84 = arith.mulf %81, %83 : vector<4x256xf32>
    %85 = arith.addf %80, %84 : vector<4x256xf32>
    %86 = vector.extract_strided_slice %75 {offsets = [0, 2], sizes = [4, 256], strides = [1, 1]} : vector<4x262xf32> to vector<4x256xf32>
    %c2 = arith.constant 2 : index
    %c0_40 = arith.constant 0 : index
    %c0_41 = arith.constant 0 : index
    %87 = vector.load %arg6[%c2, %c0_40, %c0_41] : memref<49x4x256xf32, #tpu.memory_space<vmem>>, vector<1x4x256xf32>
    %88 = vector.shape_cast %87 : vector<1x4x256xf32> to vector<4x256xf32>
    %89 = arith.mulf %86, %88 : vector<4x256xf32>
    %90 = arith.addf %85, %89 : vector<4x256xf32>
    %91 = vector.extract_strided_slice %75 {offsets = [0, 3], sizes = [4, 256], strides = [1, 1]} : vector<4x262xf32> to vector<4x256xf32>
    %c3 = arith.constant 3 : index
    %c0_42 = arith.constant 0 : index
    %c0_43 = arith.constant 0 : index
    %92 = vector.load %arg6[%c3, %c0_42, %c0_43] : memref<49x4x256xf32, #tpu.memory_space<vmem>>, vector<1x4x256xf32>
    %93 = vector.shape_cast %92 : vector<1x4x256xf32> to vector<4x256xf32>
    %94 = arith.mulf %91, %93 : vector<4x256xf32>
    %95 = arith.addf %90, %94 : vector<4x256xf32>
    %96 = vector.extract_strided_slice %75 {offsets = [0, 4], sizes = [4, 256], strides = [1, 1]} : vector<4x262xf32> to vector<4x256xf32>
    %c4 = arith.constant 4 : index
    %c0_44 = arith.constant 0 : index
    %c0_45 = arith.constant 0 : index
    %97 = vector.load %arg6[%c4, %c0_44, %c0_45] : memref<49x4x256xf32, #tpu.memory_space<vmem>>, vector<1x4x256xf32>
    %98 = vector.shape_cast %97 : vector<1x4x256xf32> to vector<4x256xf32>
    %99 = arith.mulf %96, %98 : vector<4x256xf32>
    %100 = arith.addf %95, %99 : vector<4x256xf32>
    %101 = vector.extract_strided_slice %75 {offsets = [0, 5], sizes = [4, 256], strides = [1, 1]} : vector<4x262xf32> to vector<4x256xf32>
    %c5 = arith.constant 5 : index
    %c0_46 = arith.constant 0 : index
    %c0_47 = arith.constant 0 : index
    %102 = vector.load %arg6[%c5, %c0_46, %c0_47] : memref<49x4x256xf32, #tpu.memory_space<vmem>>, vector<1x4x256xf32>
    %103 = vector.shape_cast %102 : vector<1x4x256xf32> to vector<4x256xf32>
    %104 = arith.mulf %101, %103 : vector<4x256xf32>
    %105 = arith.addf %100, %104 : vector<4x256xf32>
    %106 = vector.extract_strided_slice %75 {offsets = [0, 6], sizes = [4, 256], strides = [1, 1]} : vector<4x262xf32> to vector<4x256xf32>
    %c6 = arith.constant 6 : index
    %c0_48 = arith.constant 0 : index
    %c0_49 = arith.constant 0 : index
    %107 = vector.load %arg6[%c6, %c0_48, %c0_49] : memref<49x4x256xf32, #tpu.memory_space<vmem>>, vector<1x4x256xf32>
    %108 = vector.shape_cast %107 : vector<1x4x256xf32> to vector<4x256xf32>
    %109 = arith.mulf %106, %108 : vector<4x256xf32>
    %110 = arith.addf %105, %109 : vector<4x256xf32>
    %111 = vector.extract_strided_slice %73 {offsets = [0, 16], sizes = [4, 262], strides = [1, 1]} : vector<4x358xf32> to vector<4x262xf32>
    %112 = vector.extract_strided_slice %111 {offsets = [0, 0], sizes = [4, 256], strides = [1, 1]} : vector<4x262xf32> to vector<4x256xf32>
    %c7 = arith.constant 7 : index
    %c0_50 = arith.constant 0 : index
    %c0_51 = arith.constant 0 : index
    %113 = vector.load %arg6[%c7, %c0_50, %c0_51] : memref<49x4x256xf32, #tpu.memory_space<vmem>>, vector<1x4x256xf32>
    %114 = vector.shape_cast %113 : vector<1x4x256xf32> to vector<4x256xf32>
    %115 = arith.mulf %112, %114 : vector<4x256xf32>
    %116 = arith.addf %110, %115 : vector<4x256xf32>
    %117 = vector.extract_strided_slice %111 {offsets = [0, 1], sizes = [4, 256], strides = [1, 1]} : vector<4x262xf32> to vector<4x256xf32>
    %c8 = arith.constant 8 : index
    %c0_52 = arith.constant 0 : index
    %c0_53 = arith.constant 0 : index
    %118 = vector.load %arg6[%c8, %c0_52, %c0_53] : memref<49x4x256xf32, #tpu.memory_space<vmem>>, vector<1x4x256xf32>
    %119 = vector.shape_cast %118 : vector<1x4x256xf32> to vector<4x256xf32>
    %120 = arith.mulf %117, %119 : vector<4x256xf32>
    %121 = arith.addf %116, %120 : vector<4x256xf32>
    %122 = vector.extract_strided_slice %111 {offsets = [0, 2], sizes = [4, 256], strides = [1, 1]} : vector<4x262xf32> to vector<4x256xf32>
    %c9 = arith.constant 9 : index
    %c0_54 = arith.constant 0 : index
    %c0_55 = arith.constant 0 : index
    %123 = vector.load %arg6[%c9, %c0_54, %c0_55] : memref<49x4x256xf32, #tpu.memory_space<vmem>>, vector<1x4x256xf32>
    %124 = vector.shape_cast %123 : vector<1x4x256xf32> to vector<4x256xf32>
    %125 = arith.mulf %122, %124 : vector<4x256xf32>
    %126 = arith.addf %121, %125 : vector<4x256xf32>
    %127 = vector.extract_strided_slice %111 {offsets = [0, 3], sizes = [4, 256], strides = [1, 1]} : vector<4x262xf32> to vector<4x256xf32>
    %c10 = arith.constant 10 : index
    %c0_56 = arith.constant 0 : index
    %c0_57 = arith.constant 0 : index
    %128 = vector.load %arg6[%c10, %c0_56, %c0_57] : memref<49x4x256xf32, #tpu.memory_space<vmem>>, vector<1x4x256xf32>
    %129 = vector.shape_cast %128 : vector<1x4x256xf32> to vector<4x256xf32>
    %130 = arith.mulf %127, %129 : vector<4x256xf32>
    %131 = arith.addf %126, %130 : vector<4x256xf32>
    %132 = vector.extract_strided_slice %111 {offsets = [0, 4], sizes = [4, 256], strides = [1, 1]} : vector<4x262xf32> to vector<4x256xf32>
    %c11 = arith.constant 11 : index
    %c0_58 = arith.constant 0 : index
    %c0_59 = arith.constant 0 : index
    %133 = vector.load %arg6[%c11, %c0_58, %c0_59] : memref<49x4x256xf32, #tpu.memory_space<vmem>>, vector<1x4x256xf32>
    %134 = vector.shape_cast %133 : vector<1x4x256xf32> to vector<4x256xf32>
    %135 = arith.mulf %132, %134 : vector<4x256xf32>
    %136 = arith.addf %131, %135 : vector<4x256xf32>
    %137 = vector.extract_strided_slice %111 {offsets = [0, 5], sizes = [4, 256], strides = [1, 1]} : vector<4x262xf32> to vector<4x256xf32>
    %c12 = arith.constant 12 : index
    %c0_60 = arith.constant 0 : index
    %c0_61 = arith.constant 0 : index
    %138 = vector.load %arg6[%c12, %c0_60, %c0_61] : memref<49x4x256xf32, #tpu.memory_space<vmem>>, vector<1x4x256xf32>
    %139 = vector.shape_cast %138 : vector<1x4x256xf32> to vector<4x256xf32>
    %140 = arith.mulf %137, %139 : vector<4x256xf32>
    %141 = arith.addf %136, %140 : vector<4x256xf32>
    %142 = vector.extract_strided_slice %111 {offsets = [0, 6], sizes = [4, 256], strides = [1, 1]} : vector<4x262xf32> to vector<4x256xf32>
    %c13 = arith.constant 13 : index
    %c0_62 = arith.constant 0 : index
    %c0_63 = arith.constant 0 : index
    %143 = vector.load %arg6[%c13, %c0_62, %c0_63] : memref<49x4x256xf32, #tpu.memory_space<vmem>>, vector<1x4x256xf32>
    %144 = vector.shape_cast %143 : vector<1x4x256xf32> to vector<4x256xf32>
    %145 = arith.mulf %142, %144 : vector<4x256xf32>
    %146 = arith.addf %141, %145 : vector<4x256xf32>
    %147 = vector.extract_strided_slice %73 {offsets = [0, 32], sizes = [4, 262], strides = [1, 1]} : vector<4x358xf32> to vector<4x262xf32>
    %148 = vector.extract_strided_slice %147 {offsets = [0, 0], sizes = [4, 256], strides = [1, 1]} : vector<4x262xf32> to vector<4x256xf32>
    %c14 = arith.constant 14 : index
    %c0_64 = arith.constant 0 : index
    %c0_65 = arith.constant 0 : index
    %149 = vector.load %arg6[%c14, %c0_64, %c0_65] : memref<49x4x256xf32, #tpu.memory_space<vmem>>, vector<1x4x256xf32>
    %150 = vector.shape_cast %149 : vector<1x4x256xf32> to vector<4x256xf32>
    %151 = arith.mulf %148, %150 : vector<4x256xf32>
    %152 = arith.addf %146, %151 : vector<4x256xf32>
    %153 = vector.extract_strided_slice %147 {offsets = [0, 1], sizes = [4, 256], strides = [1, 1]} : vector<4x262xf32> to vector<4x256xf32>
    %c15 = arith.constant 15 : index
    %c0_66 = arith.constant 0 : index
    %c0_67 = arith.constant 0 : index
    %154 = vector.load %arg6[%c15, %c0_66, %c0_67] : memref<49x4x256xf32, #tpu.memory_space<vmem>>, vector<1x4x256xf32>
    %155 = vector.shape_cast %154 : vector<1x4x256xf32> to vector<4x256xf32>
    %156 = arith.mulf %153, %155 : vector<4x256xf32>
    %157 = arith.addf %152, %156 : vector<4x256xf32>
    %158 = vector.extract_strided_slice %147 {offsets = [0, 2], sizes = [4, 256], strides = [1, 1]} : vector<4x262xf32> to vector<4x256xf32>
    %c16 = arith.constant 16 : index
    %c0_68 = arith.constant 0 : index
    %c0_69 = arith.constant 0 : index
    %159 = vector.load %arg6[%c16, %c0_68, %c0_69] : memref<49x4x256xf32, #tpu.memory_space<vmem>>, vector<1x4x256xf32>
    %160 = vector.shape_cast %159 : vector<1x4x256xf32> to vector<4x256xf32>
    %161 = arith.mulf %158, %160 : vector<4x256xf32>
    %162 = arith.addf %157, %161 : vector<4x256xf32>
    %163 = vector.extract_strided_slice %147 {offsets = [0, 3], sizes = [4, 256], strides = [1, 1]} : vector<4x262xf32> to vector<4x256xf32>
    %c17 = arith.constant 17 : index
    %c0_70 = arith.constant 0 : index
    %c0_71 = arith.constant 0 : index
    %164 = vector.load %arg6[%c17, %c0_70, %c0_71] : memref<49x4x256xf32, #tpu.memory_space<vmem>>, vector<1x4x256xf32>
    %165 = vector.shape_cast %164 : vector<1x4x256xf32> to vector<4x256xf32>
    %166 = arith.mulf %163, %165 : vector<4x256xf32>
    %167 = arith.addf %162, %166 : vector<4x256xf32>
    %168 = vector.extract_strided_slice %147 {offsets = [0, 4], sizes = [4, 256], strides = [1, 1]} : vector<4x262xf32> to vector<4x256xf32>
    %c18 = arith.constant 18 : index
    %c0_72 = arith.constant 0 : index
    %c0_73 = arith.constant 0 : index
    %169 = vector.load %arg6[%c18, %c0_72, %c0_73] : memref<49x4x256xf32, #tpu.memory_space<vmem>>, vector<1x4x256xf32>
    %170 = vector.shape_cast %169 : vector<1x4x256xf32> to vector<4x256xf32>
    %171 = arith.mulf %168, %170 : vector<4x256xf32>
    %172 = arith.addf %167, %171 : vector<4x256xf32>
    %173 = vector.extract_strided_slice %147 {offsets = [0, 5], sizes = [4, 256], strides = [1, 1]} : vector<4x262xf32> to vector<4x256xf32>
    %c19 = arith.constant 19 : index
    %c0_74 = arith.constant 0 : index
    %c0_75 = arith.constant 0 : index
    %174 = vector.load %arg6[%c19, %c0_74, %c0_75] : memref<49x4x256xf32, #tpu.memory_space<vmem>>, vector<1x4x256xf32>
    %175 = vector.shape_cast %174 : vector<1x4x256xf32> to vector<4x256xf32>
    %176 = arith.mulf %173, %175 : vector<4x256xf32>
    %177 = arith.addf %172, %176 : vector<4x256xf32>
    %178 = vector.extract_strided_slice %147 {offsets = [0, 6], sizes = [4, 256], strides = [1, 1]} : vector<4x262xf32> to vector<4x256xf32>
    %c20 = arith.constant 20 : index
    %c0_76 = arith.constant 0 : index
    %c0_77 = arith.constant 0 : index
    %179 = vector.load %arg6[%c20, %c0_76, %c0_77] : memref<49x4x256xf32, #tpu.memory_space<vmem>>, vector<1x4x256xf32>
    %180 = vector.shape_cast %179 : vector<1x4x256xf32> to vector<4x256xf32>
    %181 = arith.mulf %178, %180 : vector<4x256xf32>
    %182 = arith.addf %177, %181 : vector<4x256xf32>
    %183 = vector.extract_strided_slice %73 {offsets = [0, 48], sizes = [4, 262], strides = [1, 1]} : vector<4x358xf32> to vector<4x262xf32>
    %184 = vector.extract_strided_slice %183 {offsets = [0, 0], sizes = [4, 256], strides = [1, 1]} : vector<4x262xf32> to vector<4x256xf32>
    %c21 = arith.constant 21 : index
    %c0_78 = arith.constant 0 : index
    %c0_79 = arith.constant 0 : index
    %185 = vector.load %arg6[%c21, %c0_78, %c0_79] : memref<49x4x256xf32, #tpu.memory_space<vmem>>, vector<1x4x256xf32>
    %186 = vector.shape_cast %185 : vector<1x4x256xf32> to vector<4x256xf32>
    %187 = arith.mulf %184, %186 : vector<4x256xf32>
    %188 = arith.addf %182, %187 : vector<4x256xf32>
    %189 = vector.extract_strided_slice %183 {offsets = [0, 1], sizes = [4, 256], strides = [1, 1]} : vector<4x262xf32> to vector<4x256xf32>
    %c22 = arith.constant 22 : index
    %c0_80 = arith.constant 0 : index
    %c0_81 = arith.constant 0 : index
    %190 = vector.load %arg6[%c22, %c0_80, %c0_81] : memref<49x4x256xf32, #tpu.memory_space<vmem>>, vector<1x4x256xf32>
    %191 = vector.shape_cast %190 : vector<1x4x256xf32> to vector<4x256xf32>
    %192 = arith.mulf %189, %191 : vector<4x256xf32>
    %193 = arith.addf %188, %192 : vector<4x256xf32>
    %194 = vector.extract_strided_slice %183 {offsets = [0, 2], sizes = [4, 256], strides = [1, 1]} : vector<4x262xf32> to vector<4x256xf32>
    %c23 = arith.constant 23 : index
    %c0_82 = arith.constant 0 : index
    %c0_83 = arith.constant 0 : index
    %195 = vector.load %arg6[%c23, %c0_82, %c0_83] : memref<49x4x256xf32, #tpu.memory_space<vmem>>, vector<1x4x256xf32>
    %196 = vector.shape_cast %195 : vector<1x4x256xf32> to vector<4x256xf32>
    %197 = arith.mulf %194, %196 : vector<4x256xf32>
    %198 = arith.addf %193, %197 : vector<4x256xf32>
    %199 = vector.extract_strided_slice %183 {offsets = [0, 3], sizes = [4, 256], strides = [1, 1]} : vector<4x262xf32> to vector<4x256xf32>
    %c24 = arith.constant 24 : index
    %c0_84 = arith.constant 0 : index
    %c0_85 = arith.constant 0 : index
    %200 = vector.load %arg6[%c24, %c0_84, %c0_85] : memref<49x4x256xf32, #tpu.memory_space<vmem>>, vector<1x4x256xf32>
    %201 = vector.shape_cast %200 : vector<1x4x256xf32> to vector<4x256xf32>
    %202 = arith.mulf %199, %201 : vector<4x256xf32>
    %203 = arith.addf %198, %202 : vector<4x256xf32>
    %204 = vector.extract_strided_slice %183 {offsets = [0, 4], sizes = [4, 256], strides = [1, 1]} : vector<4x262xf32> to vector<4x256xf32>
    %c25 = arith.constant 25 : index
    %c0_86 = arith.constant 0 : index
    %c0_87 = arith.constant 0 : index
    %205 = vector.load %arg6[%c25, %c0_86, %c0_87] : memref<49x4x256xf32, #tpu.memory_space<vmem>>, vector<1x4x256xf32>
    %206 = vector.shape_cast %205 : vector<1x4x256xf32> to vector<4x256xf32>
    %207 = arith.mulf %204, %206 : vector<4x256xf32>
    %208 = arith.addf %203, %207 : vector<4x256xf32>
    %209 = vector.extract_strided_slice %183 {offsets = [0, 5], sizes = [4, 256], strides = [1, 1]} : vector<4x262xf32> to vector<4x256xf32>
    %c26 = arith.constant 26 : index
    %c0_88 = arith.constant 0 : index
    %c0_89 = arith.constant 0 : index
    %210 = vector.load %arg6[%c26, %c0_88, %c0_89] : memref<49x4x256xf32, #tpu.memory_space<vmem>>, vector<1x4x256xf32>
    %211 = vector.shape_cast %210 : vector<1x4x256xf32> to vector<4x256xf32>
    %212 = arith.mulf %209, %211 : vector<4x256xf32>
    %213 = arith.addf %208, %212 : vector<4x256xf32>
    %214 = vector.extract_strided_slice %183 {offsets = [0, 6], sizes = [4, 256], strides = [1, 1]} : vector<4x262xf32> to vector<4x256xf32>
    %c27 = arith.constant 27 : index
    %c0_90 = arith.constant 0 : index
    %c0_91 = arith.constant 0 : index
    %215 = vector.load %arg6[%c27, %c0_90, %c0_91] : memref<49x4x256xf32, #tpu.memory_space<vmem>>, vector<1x4x256xf32>
    %216 = vector.shape_cast %215 : vector<1x4x256xf32> to vector<4x256xf32>
    %217 = arith.mulf %214, %216 : vector<4x256xf32>
    %218 = arith.addf %213, %217 : vector<4x256xf32>
    %219 = vector.extract_strided_slice %73 {offsets = [0, 64], sizes = [4, 262], strides = [1, 1]} : vector<4x358xf32> to vector<4x262xf32>
    %220 = vector.extract_strided_slice %219 {offsets = [0, 0], sizes = [4, 256], strides = [1, 1]} : vector<4x262xf32> to vector<4x256xf32>
    %c28 = arith.constant 28 : index
    %c0_92 = arith.constant 0 : index
    %c0_93 = arith.constant 0 : index
    %221 = vector.load %arg6[%c28, %c0_92, %c0_93] : memref<49x4x256xf32, #tpu.memory_space<vmem>>, vector<1x4x256xf32>
    %222 = vector.shape_cast %221 : vector<1x4x256xf32> to vector<4x256xf32>
    %223 = arith.mulf %220, %222 : vector<4x256xf32>
    %224 = arith.addf %218, %223 : vector<4x256xf32>
    %225 = vector.extract_strided_slice %219 {offsets = [0, 1], sizes = [4, 256], strides = [1, 1]} : vector<4x262xf32> to vector<4x256xf32>
    %c29 = arith.constant 29 : index
    %c0_94 = arith.constant 0 : index
    %c0_95 = arith.constant 0 : index
    %226 = vector.load %arg6[%c29, %c0_94, %c0_95] : memref<49x4x256xf32, #tpu.memory_space<vmem>>, vector<1x4x256xf32>
    %227 = vector.shape_cast %226 : vector<1x4x256xf32> to vector<4x256xf32>
    %228 = arith.mulf %225, %227 : vector<4x256xf32>
    %229 = arith.addf %224, %228 : vector<4x256xf32>
    %230 = vector.extract_strided_slice %219 {offsets = [0, 2], sizes = [4, 256], strides = [1, 1]} : vector<4x262xf32> to vector<4x256xf32>
    %c30 = arith.constant 30 : index
    %c0_96 = arith.constant 0 : index
    %c0_97 = arith.constant 0 : index
    %231 = vector.load %arg6[%c30, %c0_96, %c0_97] : memref<49x4x256xf32, #tpu.memory_space<vmem>>, vector<1x4x256xf32>
    %232 = vector.shape_cast %231 : vector<1x4x256xf32> to vector<4x256xf32>
    %233 = arith.mulf %230, %232 : vector<4x256xf32>
    %234 = arith.addf %229, %233 : vector<4x256xf32>
    %235 = vector.extract_strided_slice %219 {offsets = [0, 3], sizes = [4, 256], strides = [1, 1]} : vector<4x262xf32> to vector<4x256xf32>
    %c31 = arith.constant 31 : index
    %c0_98 = arith.constant 0 : index
    %c0_99 = arith.constant 0 : index
    %236 = vector.load %arg6[%c31, %c0_98, %c0_99] : memref<49x4x256xf32, #tpu.memory_space<vmem>>, vector<1x4x256xf32>
    %237 = vector.shape_cast %236 : vector<1x4x256xf32> to vector<4x256xf32>
    %238 = arith.mulf %235, %237 : vector<4x256xf32>
    %239 = arith.addf %234, %238 : vector<4x256xf32>
    %240 = vector.extract_strided_slice %219 {offsets = [0, 4], sizes = [4, 256], strides = [1, 1]} : vector<4x262xf32> to vector<4x256xf32>
    %c32 = arith.constant 32 : index
    %c0_100 = arith.constant 0 : index
    %c0_101 = arith.constant 0 : index
    %241 = vector.load %arg6[%c32, %c0_100, %c0_101] : memref<49x4x256xf32, #tpu.memory_space<vmem>>, vector<1x4x256xf32>
    %242 = vector.shape_cast %241 : vector<1x4x256xf32> to vector<4x256xf32>
    %243 = arith.mulf %240, %242 : vector<4x256xf32>
    %244 = arith.addf %239, %243 : vector<4x256xf32>
    %245 = vector.extract_strided_slice %219 {offsets = [0, 5], sizes = [4, 256], strides = [1, 1]} : vector<4x262xf32> to vector<4x256xf32>
    %c33 = arith.constant 33 : index
    %c0_102 = arith.constant 0 : index
    %c0_103 = arith.constant 0 : index
    %246 = vector.load %arg6[%c33, %c0_102, %c0_103] : memref<49x4x256xf32, #tpu.memory_space<vmem>>, vector<1x4x256xf32>
    %247 = vector.shape_cast %246 : vector<1x4x256xf32> to vector<4x256xf32>
    %248 = arith.mulf %245, %247 : vector<4x256xf32>
    %249 = arith.addf %244, %248 : vector<4x256xf32>
    %250 = vector.extract_strided_slice %219 {offsets = [0, 6], sizes = [4, 256], strides = [1, 1]} : vector<4x262xf32> to vector<4x256xf32>
    %c34 = arith.constant 34 : index
    %c0_104 = arith.constant 0 : index
    %c0_105 = arith.constant 0 : index
    %251 = vector.load %arg6[%c34, %c0_104, %c0_105] : memref<49x4x256xf32, #tpu.memory_space<vmem>>, vector<1x4x256xf32>
    %252 = vector.shape_cast %251 : vector<1x4x256xf32> to vector<4x256xf32>
    %253 = arith.mulf %250, %252 : vector<4x256xf32>
    %254 = arith.addf %249, %253 : vector<4x256xf32>
    %255 = vector.extract_strided_slice %73 {offsets = [0, 80], sizes = [4, 262], strides = [1, 1]} : vector<4x358xf32> to vector<4x262xf32>
    %256 = vector.extract_strided_slice %255 {offsets = [0, 0], sizes = [4, 256], strides = [1, 1]} : vector<4x262xf32> to vector<4x256xf32>
    %c35 = arith.constant 35 : index
    %c0_106 = arith.constant 0 : index
    %c0_107 = arith.constant 0 : index
    %257 = vector.load %arg6[%c35, %c0_106, %c0_107] : memref<49x4x256xf32, #tpu.memory_space<vmem>>, vector<1x4x256xf32>
    %258 = vector.shape_cast %257 : vector<1x4x256xf32> to vector<4x256xf32>
    %259 = arith.mulf %256, %258 : vector<4x256xf32>
    %260 = arith.addf %254, %259 : vector<4x256xf32>
    %261 = vector.extract_strided_slice %255 {offsets = [0, 1], sizes = [4, 256], strides = [1, 1]} : vector<4x262xf32> to vector<4x256xf32>
    %c36 = arith.constant 36 : index
    %c0_108 = arith.constant 0 : index
    %c0_109 = arith.constant 0 : index
    %262 = vector.load %arg6[%c36, %c0_108, %c0_109] : memref<49x4x256xf32, #tpu.memory_space<vmem>>, vector<1x4x256xf32>
    %263 = vector.shape_cast %262 : vector<1x4x256xf32> to vector<4x256xf32>
    %264 = arith.mulf %261, %263 : vector<4x256xf32>
    %265 = arith.addf %260, %264 : vector<4x256xf32>
    %266 = vector.extract_strided_slice %255 {offsets = [0, 2], sizes = [4, 256], strides = [1, 1]} : vector<4x262xf32> to vector<4x256xf32>
    %c37 = arith.constant 37 : index
    %c0_110 = arith.constant 0 : index
    %c0_111 = arith.constant 0 : index
    %267 = vector.load %arg6[%c37, %c0_110, %c0_111] : memref<49x4x256xf32, #tpu.memory_space<vmem>>, vector<1x4x256xf32>
    %268 = vector.shape_cast %267 : vector<1x4x256xf32> to vector<4x256xf32>
    %269 = arith.mulf %266, %268 : vector<4x256xf32>
    %270 = arith.addf %265, %269 : vector<4x256xf32>
    %271 = vector.extract_strided_slice %255 {offsets = [0, 3], sizes = [4, 256], strides = [1, 1]} : vector<4x262xf32> to vector<4x256xf32>
    %c38 = arith.constant 38 : index
    %c0_112 = arith.constant 0 : index
    %c0_113 = arith.constant 0 : index
    %272 = vector.load %arg6[%c38, %c0_112, %c0_113] : memref<49x4x256xf32, #tpu.memory_space<vmem>>, vector<1x4x256xf32>
    %273 = vector.shape_cast %272 : vector<1x4x256xf32> to vector<4x256xf32>
    %274 = arith.mulf %271, %273 : vector<4x256xf32>
    %275 = arith.addf %270, %274 : vector<4x256xf32>
    %276 = vector.extract_strided_slice %255 {offsets = [0, 4], sizes = [4, 256], strides = [1, 1]} : vector<4x262xf32> to vector<4x256xf32>
    %c39 = arith.constant 39 : index
    %c0_114 = arith.constant 0 : index
    %c0_115 = arith.constant 0 : index
    %277 = vector.load %arg6[%c39, %c0_114, %c0_115] : memref<49x4x256xf32, #tpu.memory_space<vmem>>, vector<1x4x256xf32>
    %278 = vector.shape_cast %277 : vector<1x4x256xf32> to vector<4x256xf32>
    %279 = arith.mulf %276, %278 : vector<4x256xf32>
    %280 = arith.addf %275, %279 : vector<4x256xf32>
    %281 = vector.extract_strided_slice %255 {offsets = [0, 5], sizes = [4, 256], strides = [1, 1]} : vector<4x262xf32> to vector<4x256xf32>
    %c40 = arith.constant 40 : index
    %c0_116 = arith.constant 0 : index
    %c0_117 = arith.constant 0 : index
    %282 = vector.load %arg6[%c40, %c0_116, %c0_117] : memref<49x4x256xf32, #tpu.memory_space<vmem>>, vector<1x4x256xf32>
    %283 = vector.shape_cast %282 : vector<1x4x256xf32> to vector<4x256xf32>
    %284 = arith.mulf %281, %283 : vector<4x256xf32>
    %285 = arith.addf %280, %284 : vector<4x256xf32>
    %286 = vector.extract_strided_slice %255 {offsets = [0, 6], sizes = [4, 256], strides = [1, 1]} : vector<4x262xf32> to vector<4x256xf32>
    %c41 = arith.constant 41 : index
    %c0_118 = arith.constant 0 : index
    %c0_119 = arith.constant 0 : index
    %287 = vector.load %arg6[%c41, %c0_118, %c0_119] : memref<49x4x256xf32, #tpu.memory_space<vmem>>, vector<1x4x256xf32>
    %288 = vector.shape_cast %287 : vector<1x4x256xf32> to vector<4x256xf32>
    %289 = arith.mulf %286, %288 : vector<4x256xf32>
    %290 = arith.addf %285, %289 : vector<4x256xf32>
    %291 = vector.extract_strided_slice %73 {offsets = [0, 96], sizes = [4, 262], strides = [1, 1]} : vector<4x358xf32> to vector<4x262xf32>
    %292 = vector.extract_strided_slice %291 {offsets = [0, 0], sizes = [4, 256], strides = [1, 1]} : vector<4x262xf32> to vector<4x256xf32>
    %c42 = arith.constant 42 : index
    %c0_120 = arith.constant 0 : index
    %c0_121 = arith.constant 0 : index
    %293 = vector.load %arg6[%c42, %c0_120, %c0_121] : memref<49x4x256xf32, #tpu.memory_space<vmem>>, vector<1x4x256xf32>
    %294 = vector.shape_cast %293 : vector<1x4x256xf32> to vector<4x256xf32>
    %295 = arith.mulf %292, %294 : vector<4x256xf32>
    %296 = arith.addf %290, %295 : vector<4x256xf32>
    %297 = vector.extract_strided_slice %291 {offsets = [0, 1], sizes = [4, 256], strides = [1, 1]} : vector<4x262xf32> to vector<4x256xf32>
    %c43 = arith.constant 43 : index
    %c0_122 = arith.constant 0 : index
    %c0_123 = arith.constant 0 : index
    %298 = vector.load %arg6[%c43, %c0_122, %c0_123] : memref<49x4x256xf32, #tpu.memory_space<vmem>>, vector<1x4x256xf32>
    %299 = vector.shape_cast %298 : vector<1x4x256xf32> to vector<4x256xf32>
    %300 = arith.mulf %297, %299 : vector<4x256xf32>
    %301 = arith.addf %296, %300 : vector<4x256xf32>
    %302 = vector.extract_strided_slice %291 {offsets = [0, 2], sizes = [4, 256], strides = [1, 1]} : vector<4x262xf32> to vector<4x256xf32>
    %c44 = arith.constant 44 : index
    %c0_124 = arith.constant 0 : index
    %c0_125 = arith.constant 0 : index
    %303 = vector.load %arg6[%c44, %c0_124, %c0_125] : memref<49x4x256xf32, #tpu.memory_space<vmem>>, vector<1x4x256xf32>
    %304 = vector.shape_cast %303 : vector<1x4x256xf32> to vector<4x256xf32>
    %305 = arith.mulf %302, %304 : vector<4x256xf32>
    %306 = arith.addf %301, %305 : vector<4x256xf32>
    %307 = vector.extract_strided_slice %291 {offsets = [0, 3], sizes = [4, 256], strides = [1, 1]} : vector<4x262xf32> to vector<4x256xf32>
    %c45 = arith.constant 45 : index
    %c0_126 = arith.constant 0 : index
    %c0_127 = arith.constant 0 : index
    %308 = vector.load %arg6[%c45, %c0_126, %c0_127] : memref<49x4x256xf32, #tpu.memory_space<vmem>>, vector<1x4x256xf32>
    %309 = vector.shape_cast %308 : vector<1x4x256xf32> to vector<4x256xf32>
    %310 = arith.mulf %307, %309 : vector<4x256xf32>
    %311 = arith.addf %306, %310 : vector<4x256xf32>
    %312 = vector.extract_strided_slice %291 {offsets = [0, 4], sizes = [4, 256], strides = [1, 1]} : vector<4x262xf32> to vector<4x256xf32>
    %c46 = arith.constant 46 : index
    %c0_128 = arith.constant 0 : index
    %c0_129 = arith.constant 0 : index
    %313 = vector.load %arg6[%c46, %c0_128, %c0_129] : memref<49x4x256xf32, #tpu.memory_space<vmem>>, vector<1x4x256xf32>
    %314 = vector.shape_cast %313 : vector<1x4x256xf32> to vector<4x256xf32>
    %315 = arith.mulf %312, %314 : vector<4x256xf32>
    %316 = arith.addf %311, %315 : vector<4x256xf32>
    %317 = vector.extract_strided_slice %291 {offsets = [0, 5], sizes = [4, 256], strides = [1, 1]} : vector<4x262xf32> to vector<4x256xf32>
    %c47 = arith.constant 47 : index
    %c0_130 = arith.constant 0 : index
    %c0_131 = arith.constant 0 : index
    %318 = vector.load %arg6[%c47, %c0_130, %c0_131] : memref<49x4x256xf32, #tpu.memory_space<vmem>>, vector<1x4x256xf32>
    %319 = vector.shape_cast %318 : vector<1x4x256xf32> to vector<4x256xf32>
    %320 = arith.mulf %317, %319 : vector<4x256xf32>
    %321 = arith.addf %316, %320 : vector<4x256xf32>
    %322 = vector.extract_strided_slice %291 {offsets = [0, 6], sizes = [4, 256], strides = [1, 1]} : vector<4x262xf32> to vector<4x256xf32>
    %c48 = arith.constant 48 : index
    %c0_132 = arith.constant 0 : index
    %c0_133 = arith.constant 0 : index
    %323 = vector.load %arg6[%c48, %c0_132, %c0_133] : memref<49x4x256xf32, #tpu.memory_space<vmem>>, vector<1x4x256xf32>
    %324 = vector.shape_cast %323 : vector<1x4x256xf32> to vector<4x256xf32>
    %325 = arith.mulf %322, %324 : vector<4x256xf32>
    %326 = arith.addf %321, %325 : vector<4x256xf32>
    %327 = vector.extract_strided_slice %326 {offsets = [0, 0], sizes = [2, 256], strides = [1, 1]} : vector<4x256xf32> to vector<2x256xf32>
    %328 = vector.extract_strided_slice %326 {offsets = [2, 0], sizes = [2, 256], strides = [1, 1]} : vector<4x256xf32> to vector<2x256xf32>
    %329 = arith.addf %327, %328 : vector<2x256xf32>
    %c0_134 = arith.constant 0 : index
    %330 = memref.load %arg7[%c0_134] : memref<2xf32, #tpu.memory_space<smem>>
    %331 = vector.broadcast %330 : f32 to vector<2x256xf32>
    %332 = arith.mulf %329, %331 : vector<2x256xf32>
    %c1_135 = arith.constant 1 : index
    %333 = memref.load %arg7[%c1_135] : memref<2xf32, #tpu.memory_space<smem>>
    %334 = vector.broadcast %333 : f32 to vector<2x256xf32>
    %335 = arith.addf %332, %334 : vector<2x256xf32>
    %336 = arith.negf %335 : vector<2x256xf32>
    %337 = math.exp %336 : vector<2x256xf32>
    %cst_136 = arith.constant 1.000000e+00 : f32
    %338 = vector.broadcast %cst_136 : f32 to vector<2x256xf32>
    %339 = arith.addf %338, %337 : vector<2x256xf32>
    %340 = arith.divf %338, %339 : vector<2x256xf32>
    %341 = vector.shape_cast %340 : vector<2x256xf32> to vector<2x1x256xf32>
    %342 = vector.broadcast %341 : vector<2x1x256xf32> to vector<2x16x256xf32>
    %343 = arith.mulf %66, %342 : vector<2x16x256xf32>
    %c0_137 = arith.constant 0 : index
    %c0_138 = arith.constant 0 : index
    %c0_139 = arith.constant 0 : index
    %344 = vector.load %arg8[%c0_137, %c0_138, %c0_139] : memref<2x16x256xf32, #tpu.memory_space<vmem>>, vector<2x16x256xf32>
    tpu.vector_store %arg8[%c0_137, %c0_138, %c0_139], %343 {strides = array<i32>} : memref<2x16x256xf32, #tpu.memory_space<vmem>>, vector<2x16x256xf32>,
    return
  }
  func.func @transform_0(%arg0: i32) -> (i32, i32, i32) {
    %c0_i32 = arith.constant 0 : i32
    %c0_i32_0 = arith.constant 0 : i32
    %c0_i32_1 = arith.constant 0 : i32
    return %arg0, %c0_i32, %c0_i32_0 : i32, i32, i32
  }
  func.func @transform_1(%arg0: i32) -> (i32, i32) {
    %c0_i32 = arith.constant 0 : i32
    %c0_i32_0 = arith.constant 0 : i32
    %c0_i32_1 = arith.constant 0 : i32
    return %c0_i32, %c0_i32_0 : i32, i32
  }
  func.func @transform_2(%arg0: i32) -> (i32, i32) {
    %c0_i32 = arith.constant 0 : i32
    %c0_i32_0 = arith.constant 0 : i32
    %c0_i32_1 = arith.constant 0 : i32
    return %c0_i32, %c0_i32_0 : i32, i32
  }
  func.func @transform_3(%arg0: i32) -> (i32, i32) {
    %c0_i32 = arith.constant 0 : i32
    %c0_i32_0 = arith.constant 0 : i32
    %c0_i32_1 = arith.constant 0 : i32
    return %c0_i32, %c0_i32_0 : i32, i32
  }
  func.func @transform_4(%arg0: i32) -> (i32, i32) {
    %c0_i32 = arith.constant 0 : i32
    %c0_i32_0 = arith.constant 0 : i32
    %c0_i32_1 = arith.constant 0 : i32
    return %c0_i32, %c0_i32_0 : i32, i32
  }
  func.func @transform_5(%arg0: i32) -> (i32, i32, i32) {
    %c0_i32 = arith.constant 0 : i32
    %c0_i32_0 = arith.constant 0 : i32
    %c0_i32_1 = arith.constant 0 : i32
    %c0_i32_2 = arith.constant 0 : i32
    return %c0_i32, %c0_i32_0, %c0_i32_1 : i32, i32, i32
  }
  func.func @transform_6(%arg0: i32) -> i32 {
    %c0_i32 = arith.constant 0 : i32
    %c0_i32_0 = arith.constant 0 : i32
    return %c0_i32 : i32
  }
  func.func @transform_7(%arg0: i32) -> (i32, i32, i32) {
    %c0_i32 = arith.constant 0 : i32
    %c0_i32_0 = arith.constant 0 : i32
    %c0_i32_1 = arith.constant 0 : i32
    return %arg0, %c0_i32, %c0_i32_0 : i32, i32, i32
  }
}

</mosaic_0001>

<llo_original>
// kernel: tpu_custom_call.1
$region0: #{tpu_custom_call.1}
  #allocation0 [shape = 'u32[]', space=smem, size = 0x4, offset = 0x4, fixed_abs, tag = 'smem constant byte address 0x4 - core index']
  #allocation1 [shape = 'u32[72,128]{1,0:T(1,128)}', space=vmem, size = 0x9000, scoped, tag = 'internal scratch']
  %s0 = inlined_call_operand.hbm [shape: f32[2,16,256], index: 0, kind: input, shape index: {}]
  %s1 = inlined_call_operand.vmem [shape: f32[16,4], index: 1, kind: input, shape index: {}]
  %s2 = inlined_call_operand.vmem [shape: f32[1,4], index: 2, kind: input, shape index: {}]
  %s3 = inlined_call_operand.vmem [shape: f32[4,16], index: 3, kind: input, shape index: {}]
  %s4 = inlined_call_operand.vmem [shape: f32[1,16], index: 4, kind: input, shape index: {}]
  %s5 = inlined_call_operand.hbm [shape: f32[49,4,256], index: 5, kind: input, shape index: {}]
  %s6 = inlined_call_operand.vmem [shape: f32[2], index: 6, kind: input, shape index: {}]
  %s7 = inlined_call_operand.hbm [shape: f32[2,16,256], index: 7, kind: output, shape index: {}]
  %s8 = sld [smem:[#allocation0]]
  $region50: #{tpu_custom_call.1} parent=0
    _
  %s10 = ssub.s32 1, %s8
  %s11 = scalar_select 0, %s10, %s8
  $region1: #{tpu_custom_call.1} parent=0
    #allocation2 [shape = 'u8[32768]{0}', space=vmem, size = 0x8000, scoped, tag = 'input window, operand 0, single buffered']
    #allocation3 [shape = 's32[1]{0}', space=sflag, size = 0x4, scoped, tag = 'scoped memory for tpu_custom_call.1']
    #allocation4 [shape = 's32[1]{0}', space=sflag, size = 0x4, scoped, tag = 'scoped memory for tpu_custom_call.1']
    #allocation5 [shape = 's32[1]{0}', space=sflag, size = 0x4, scoped, tag = 'scoped memory for tpu_custom_call.1']
    #allocation6 [shape = 'u8[200704]{0}', space=vmem, size = 0x31000, scoped, tag = 'input window, operand 5, single buffered']
    #allocation7 [shape = 's32[1]{0}', space=sflag, size = 0x4, scoped, tag = 'scoped memory for tpu_custom_call.1']
    #allocation8 [shape = 'u8[512]{0}', space=smem, size = 0x200, scoped, tag = 'input window, operand 6, single buffered']
    #allocation9 [shape = 'u8[32768]{0}', space=vmem, size = 0x8000, scoped, tag = 'output window, operand 0, single buffered']
    %12 = vsyncpa [#allocation3], 0
    %13 = vsyncpa [#allocation7], 0
    %14 = vsyncpa [#allocation5], 0
    %15 = vsyncpa [#allocation4], 0
    // Predicated region
    $region2: #{tpu_custom_call.1} parent=1 // pred_check
      _
    $region3: #{tpu_custom_call.1} parent=1 // pred_check_branch
      %17 = sbr.rel (0) target = $region5
    $region4: #{tpu_custom_call.1} parent=1 // pred_region
      %19 = vsyncadd [#allocation3], 0
      %s20 = sshll.u32 %s0, 4
      %s21 = int_to_ptr.hbm [resolvable:$true] %s20
      %s22 = sshll.u32 [#allocation2], 4
      %s23 = int_to_ptr.vmem [resolvable:$true] %s22
      %28 = dma.hbm_to_vmem [thread:$0]  %s21, 1024, %s23, [#allocation3], 256, 256, 16
    $region5: #{tpu_custom_call.1} parent=1 // pred_fallthru
      _
    // Predicated region
    $region6: #{tpu_custom_call.1} parent=1 // pred_check
      _
    $region7: #{tpu_custom_call.1} parent=1 // pred_check_branch
      %30 = sbr.rel (0) target = $region9
    $region8: #{tpu_custom_call.1} parent=1 // pred_region
      _
    $region9: #{tpu_custom_call.1} parent=1 // pred_fallthru
      _
    // Predicated region
    $region10: #{tpu_custom_call.1} parent=1 // pred_check
      _
    $region11: #{tpu_custom_call.1} parent=1 // pred_check_branch
      %32 = sbr.rel (0) target = $region13
    $region12: #{tpu_custom_call.1} parent=1 // pred_region
      _
    $region13: #{tpu_custom_call.1} parent=1 // pred_fallthru
      _
    // Predicated region
    $region14: #{tpu_custom_call.1} parent=1 // pred_check
      _
    $region15: #{tpu_custom_call.1} parent=1 // pred_check_branch
      %34 = sbr.rel (0) target = $region17
    $region16: #{tpu_custom_call.1} parent=1 // pred_region
      _
    $region17: #{tpu_custom_call.1} parent=1 // pred_fallthru
      _
    // Predicated region
    $region18: #{tpu_custom_call.1} parent=1 // pred_check
      _
    $region19: #{tpu_custom_call.1} parent=1 // pred_check_branch
      %36 = sbr.rel (0) target = $region21
    $region20: #{tpu_custom_call.1} parent=1 // pred_region
      _
    $region21: #{tpu_custom_call.1} parent=1 // pred_fallthru
      _
    // Predicated region
    $region22: #{tpu_custom_call.1} parent=1 // pred_check
      _
    $region23: #{tpu_custom_call.1} parent=1 // pred_check_branch
      %38 = sbr.rel (0) target = $region25
    $region24: #{tpu_custom_call.1} parent=1 // pred_region
      %40 = vsyncadd [#allocation7], 0
      %s41 = sshll.u32 %s5, 4
      %s42 = int_to_ptr.hbm [resolvable:$true] %s41
      %s43 = sshll.u32 [#allocation6], 4
      %s44 = int_to_ptr.vmem [resolvable:$true] %s43
      %49 = dma.hbm_to_vmem [thread:$0]  %s42, 6272, %s44, [#allocation7], 128, 128, 8
    $region25: #{tpu_custom_call.1} parent=1 // pred_fallthru
      _
    // Predicated region
    $region26: #{tpu_custom_call.1} parent=1 // pred_check
      _
    $region27: #{tpu_custom_call.1} parent=1 // pred_check_branch
      %51 = sbr.rel (0) target = $region29
    $region28: #{tpu_custom_call.1} parent=1 // pred_region
      %53 = vsyncadd [#allocation5], 0
      %s55 = sshll.u32 %s6, 4
      %s56 = int_to_ptr.vmem [resolvable:$true] %s55
      %58 = dma.vmem_to_smem %s56, 16, [#allocation8], [#allocation5]
    $region29: #{tpu_custom_call.1} parent=1 // pred_fallthru
      _
    // Predicated region
    $region30: #{tpu_custom_call.1} parent=1 // pred_check
      _
    $region31: #{tpu_custom_call.1} parent=1 // pred_check_branch
      %60 = sbr.rel (0) target = $region33
    $region32: #{tpu_custom_call.1} parent=1 // pred_region
      %62 = dma.done [#allocation3], 1024
    $region33: #{tpu_custom_call.1} parent=1 // pred_fallthru
      _
    // Predicated region
    $region34: #{tpu_custom_call.1} parent=1 // pred_check
      _
    $region35: #{tpu_custom_call.1} parent=1 // pred_check_branch
      %64 = sbr.rel (0) target = $region37
    $region36: #{tpu_custom_call.1} parent=1 // pred_region
      %66 = dma.done [#allocation7], 6272
    $region37: #{tpu_custom_call.1} parent=1 // pred_fallthru
      _
    // Predicated region
    $region38: #{tpu_custom_call.1} parent=1 // pred_check
      _
    $region39: #{tpu_custom_call.1} parent=1 // pred_check_branch
      %68 = sbr.rel (0) target = $region41
    $region40: #{tpu_custom_call.1} parent=1 // pred_region
      %70 = dma.done [#allocation5], 16
    $region41: #{tpu_custom_call.1} parent=1 // pred_fallthru
      _
    %71 = sfence
    %v72 = vld [vmem:[#allocation2] sm:$0xff]
    %v73 = vld [vmem:[#allocation2 + $0x8] sm:$0xff]
    %v74 = vld [vmem:[#allocation2 + $0x10] sm:$0xff]
    %v75 = vld [vmem:[#allocation2 + $0x18] sm:$0xff]
    %v76 = vld [vmem:[#allocation2 + $0x20] sm:$0xff]
    %v77 = vld [vmem:[#allocation2 + $0x28] sm:$0xff]
    %v78 = vld [vmem:[#allocation2 + $0x30] sm:$0xff]
    %v79 = vld [vmem:[#allocation2 + $0x38] sm:$0xff]
    %v80 = vmax.f32 %v72, %v73
    %81 = vmax.xlane.f32.xlu0 %v80
    %v82 = vpop.xlane.xlu0 %81
    %v83 = vmax.f32 %v74, %v75
    %84 = vmax.xlane.f32.xlu0 %v83
    %v85 = vpop.xlane.xlu0 %84
    %v86 = vmax.f32 %v76, %v77
    %87 = vmax.xlane.f32.xlu0 %v86
    %v88 = vpop.xlane.xlu0 %87
    %v89 = vmax.f32 %v78, %v79
    %90 = vmax.xlane.f32.xlu0 %v89
    %v91 = vpop.xlane.xlu0 %90
    %v92 = vadd.f32 %v72, %v73
    %93 = vadd.xlane.f32.xlu0 %v92
    %v94 = vpop.xlane.xlu0 %93
    %v95 = vadd.f32 %v74, %v75
    %96 = vadd.xlane.f32.xlu0 %v95
    %v97 = vpop.xlane.xlu0 %96
    %v98 = vadd.f32 %v76, %v77
    %99 = vadd.xlane.f32.xlu0 %v98
    %v100 = vpop.xlane.xlu0 %99
    %v101 = vadd.f32 %v78, %v79
    %102 = vadd.xlane.f32.xlu0 %v101
    %v103 = vpop.xlane.xlu0 %102
    %v104 = vmul.f32 %v94, 0.00390625
    %v105 = vmul.f32 %v97, 0.00390625
    %v106 = vmul.f32 %v100, 0.00390625
    %v107 = vmul.f32 %v103, 0.00390625
    %v112 = vlaneseq
    %v113 = vand.u32 %v112, 127
    %v114 = vperm.slane %v104, %v113
    %v115 = vadd.s32 %v113, 4294967288
    %v116 = vperm.slane %v105, %v115
    %vm117 = vcmask 130112
    %v118 = vsel %vm117, %v116, %v114
    %v119 = vperm.slane %v106, %v113
    %v120 = vperm.slane %v107, %v115
    %v121 = vsel %vm117, %v120, %v119
    %vm122 = vcmask 1041409
    %v123 = vsel %vm122, %v121, %v118
    %v129 = vperm.slane %v82, %v113
    %v130 = vperm.slane %v85, %v115
    %v131 = vsel %vm117, %v130, %v129
    %v132 = vperm.slane %v88, %v113
    %v133 = vperm.slane %v91, %v115
    %v134 = vsel %vm117, %v133, %v132
    %vm135 = vcmask 1043459
    %v136 = vsel %vm135, %v134, %v131
    %vm138 = vcmask 1041408
    %v139 = vsel %vm138, %v123, %v136
    %v140 = vld [vmem:[%s1] sm:$0xff]
    %v141 = vld [vmem:[%s1 + $0x8] sm:$0xff]
    %v142 = vld [vmem:[%s2] sm:$0x1]
    %v144 = vperm.slane %v142, 0
    %vm146 = vcmask 130048
    %v148 = vsel %vm146, %v139, 0
    %150 = vmatpush.msra.mxu0 0.0
    %151 = vmatpush.msra.mxu0 0.0
    %152 = vmatpush.msra.mxu0 0.0
    %153 = vmatpush.msra.mxu0 0.0
    %154 = vmatpush.msra.mxu0 0.0
    %155 = vmatpush.msra.mxu0 0.0
    %156 = vmatpush.msra.mxu0 0.0
    %157 = vmatpush.msra.mxu0 0.0
    %158 = vmatpush.msra.mxu0 0.0
    %159 = vmatpush.msra.mxu0 0.0
    %160 = vmatpush.msra.mxu0 0.0
    %161 = vmatpush.msra.mxu0 0.0
    %162 = vmatpush.msra.mxu0 0.0
    %163 = vmatpush.msra.mxu0 0.0
    %164 = vmatpush.msra.mxu0 %v141
    %165 = vmatpush.msra.mxu0 %v140
    %166 = vmatmul.f32.gmra.mxu0 %v148
    %v167 = vpop.f32.mrf.mxu0
    %v168 = vadd.f32 %v144, %v167
    %169 = vdwg.mxu0
    %v170 = vmul.f32 %v168, 0.5
    %v171 = vmul.f32 %v168, 0.70710677
    %v172 = vand.u32 2147483647, %v171
    %v173 = vmul.f32 %v172, 0.3275911
    %v174 = vadd.f32 %v173, 1.0
    %v175 = vrcp.pop %v174
    %v176 = vmul.f32 %v174, %v175
    %v177 = vsub.f32 1.0, %v176
    %v178 = vmul.f32 %v175, %v177
    %v179 = vadd.f32 %v175, %v178
    %vm180 = vweird.f32 %v174
    %vm181 = vweird.f32 %v175
    %vm182 = vmor %vm180, %vm181
    %v183 = vsel %vm182, %v175, %v179
    %v184 = vand.u32 2147483647, %v174
    %vm185 = vcmp.eq.f32.partialorder %v184, 8.507059e+37
    %v186 = vand.u32 %v174, 2147483648
    %v187 = vor.u32 1.1754944e-38, %v186
    %v188 = vsel %vm185, %v187, %v183
    %v189 = vmul.f32 1.0, %v188
    %v190 = vmul.f32 %v189, 1.0614054
    %v191 = vadd.f32 %v190, -1.4531521
    %v192 = vmul.f32 %v191, %v189
    %v193 = vadd.f32 %v192, 1.4214138
    %v194 = vmul.f32 %v193, %v189
    %v195 = vadd.f32 %v194, -0.28449672
    %v196 = vmul.f32 %v195, %v189
    %v197 = vadd.f32 %v196, 0.2548296
    %v198 = vmul.f32 %v197, %v189
    %v199 = vsub.f32 0.0, %v172
    %v200 = vmul.f32 %v199, %v172
    %v201 = vmul.f32 %v200, 1.442695
    %v202 = vpow.pop %v201
    %v203 = vmul.f32 %v198, %v202
    %v204 = vsub.f32 1.0, %v203
    %vm205 = vcmp.lt.f32.partialorder %v171, 0.0
    %v206 = vsub.f32 0.0, %v204
    %v207 = vsel %vm205, %v206, %v204
    %v208 = vadd.f32 %v207, 1.0
    %v209 = vmul.f32 %v170, %v208
    %v210 = vld [vmem:[%s3] sm:$0xf]
    %v211 = vld [vmem:[%s4] sm:$0x1]
    %v213 = vperm.slane %v211, 0
    %vm215 = vcmask 31744
    %v217 = vsel %vm215, %v209, 0
    %vm219 = vcmask 1043456
    %v221 = vsel %vm219, %v210, 0
    %223 = vmatpush.msra.mxu0 0.0
    %224 = vmatpush.msra.mxu0 0.0
    %225 = vmatpush.msra.mxu0 0.0
    %226 = vmatpush.msra.mxu0 0.0
    %227 = vmatpush.msra.mxu0 0.0
    %228 = vmatpush.msra.mxu0 0.0
    %229 = vmatpush.msra.mxu0 0.0
    %230 = vmatpush.msra.mxu0 0.0
    %231 = vmatpush.msra.mxu0 0.0
    %232 = vmatpush.msra.mxu0 0.0
    %233 = vmatpush.msra.mxu0 0.0
    %234 = vmatpush.msra.mxu0 0.0
    %235 = vmatpush.msra.mxu0 0.0
    %236 = vmatpush.msra.mxu0 0.0
    %237 = vmatpush.msra.mxu0 0.0
    %238 = vmatpush.msra.mxu0 %v221
    %239 = vmatmul.f32.gmra.mxu0 %v217
    %v240 = vpop.f32.mrf.mxu0
    %v241 = vadd.f32 %v213, %v240
    %242 = vdwg.mxu0
    %v244 = vrot.slane %v241, 2
    %v246 = vadd.f32 %v241, %v244
    %v247 = vxor.u32 %v246, 2147483648
    %v248 = vmul.f32 %v247, 1.442695
    %v249 = vpow.pop %v248
    %v250 = vadd.f32 %v249, 1.0
    %v251 = vrcp.pop %v250
    %v252 = vmul.f32 %v250, %v251
    %v253 = vsub.f32 1.0, %v252
    %v254 = vmul.f32 %v251, %v253
    %v255 = vadd.f32 %v251, %v254
    %vm256 = vweird.f32 %v250
    %vm257 = vweird.f32 %v251
    %vm258 = vmor %vm256, %vm257
    %v259 = vsel %vm258, %v251, %v255
    %v260 = vand.u32 2147483647, %v250
    %vm261 = vcmp.eq.f32.partialorder %v260, 8.507059e+37
    %v262 = vand.u32 %v250, 2147483648
    %v263 = vor.u32 1.1754944e-38, %v262
    %v264 = vsel %vm261, %v263, %v259
    %v265 = vmul.f32 1.0, %v264
    %v266 = vperm.slane %v265, 0
    %v267 = vlaneseq
    %v268 = vshrl.u32 %v267, 7
    %270 = vset.pattern.permute.xlu0 %v268
    %271 = vperm.xlu0 %270, %v266
    %v272 = vpop.permute.xlu0 %271
    %v273 = vlaneseq
    %v274 = vshrl.u32 %v273, 7
    %v275 = vadd.s32 %v274, 8
    %276 = vset.pattern.permute.xlu0 %v275
    %277 = vperm.xlu0 %276, %v266
    %v278 = vpop.permute.xlu0 %277
    %v279 = vperm.slane %v265, 1
    %v280 = vlaneseq
    %v281 = vshrl.u32 %v280, 7
    %283 = vset.pattern.permute.xlu0 %v281
    %284 = vperm.xlu0 %283, %v279
    %v285 = vpop.permute.xlu0 %284
    %v286 = vlaneseq
    %v287 = vshrl.u32 %v286, 7
    %v288 = vadd.s32 %v287, 8
    %289 = vset.pattern.permute.xlu0 %v288
    %290 = vperm.xlu0 %289, %v279
    %v291 = vpop.permute.xlu0 %290
    %v292 = vmul.f32 %v72, %v272
    %v293 = vmul.f32 %v73, %v272
    %v294 = vmul.f32 %v74, %v278
    %v295 = vmul.f32 %v75, %v278
    %v296 = vmul.f32 %v76, %v285
    %v297 = vmul.f32 %v77, %v285
    %v298 = vmul.f32 %v78, %v291
    %v299 = vmul.f32 %v79, %v291
    %v300 = vmax.f32 %v292, %v294
    %v301 = vrot.slane %v300, 4
    %v302 = vmax.f32 %v300, %v301
    %v303 = vrot.slane %v302, 2
    %v304 = vmax.f32 %v302, %v303
    %v305 = vrot.slane %v304, 1
    %v306 = vmax.f32 %v304, %v305
    %v307 = vmax.f32 %v293, %v295
    %v308 = vrot.slane %v307, 4
    %v309 = vmax.f32 %v307, %v308
    %v310 = vrot.slane %v309, 2
    %v311 = vmax.f32 %v309, %v310
    %v312 = vrot.slane %v311, 1
    %v313 = vmax.f32 %v311, %v312
    %v314 = vmax.f32 %v296, %v298
    %v315 = vrot.slane %v314, 4
    %v316 = vmax.f32 %v314, %v315
    %v317 = vrot.slane %v316, 2
    %v318 = vmax.f32 %v316, %v317
    %v319 = vrot.slane %v318, 1
    %v320 = vmax.f32 %v318, %v319
    %v321 = vmax.f32 %v297, %v299
    %v322 = vrot.slane %v321, 4
    %v323 = vmax.f32 %v321, %v322
    %v324 = vrot.slane %v323, 2
    %v325 = vmax.f32 %v323, %v324
    %v326 = vrot.slane %v325, 1
    %v327 = vmax.f32 %v325, %v326
    %v328 = vadd.f32 %v292, %v294
    %v329 = vrot.slane %v328, 4
    %v330 = vadd.f32 %v328, %v329
    %v331 = vrot.slane %v330, 2
    %v332 = vadd.f32 %v330, %v331
    %v333 = vrot.slane %v332, 1
    %v334 = vadd.f32 %v332, %v333
    %v335 = vadd.f32 %v293, %v295
    %v336 = vrot.slane %v335, 4
    %v337 = vadd.f32 %v335, %v336
    %v338 = vrot.slane %v337, 2
    %v339 = vadd.f32 %v337, %v338
    %v340 = vrot.slane %v339, 1
    %v341 = vadd.f32 %v339, %v340
    %v342 = vadd.f32 %v296, %v298
    %v343 = vrot.slane %v342, 4
    %v344 = vadd.f32 %v342, %v343
    %v345 = vrot.slane %v344, 2
    %v346 = vadd.f32 %v344, %v345
    %v347 = vrot.slane %v346, 1
    %v348 = vadd.f32 %v346, %v347
    %v349 = vadd.f32 %v297, %v299
    %v350 = vrot.slane %v349, 4
    %v351 = vadd.f32 %v349, %v350
    %v352 = vrot.slane %v351, 2
    %v353 = vadd.f32 %v351, %v352
    %v354 = vrot.slane %v353, 1
    %v355 = vadd.f32 %v353, %v354
    %v356 = vmul.f32 %v334, 0.0625
    %v357 = vmul.f32 %v341, 0.0625
    %v358 = vmul.f32 %v348, 0.0625
    %v359 = vmul.f32 %v355, 0.0625
    %v364 = vsel %vm122, %v320, %v306
    %v365 = vsel %vm122, %v327, %v313
    %v372 = vsel %vm135, %v358, %v356
    %v373 = vsel %vm135, %v359, %v357
    %v376 = vsel %vm138, %v364, %v372
    %v377 = vsel %vm138, %v365, %v373
    %380 = vrot.lane.b32.xlu0 %v376, 51
    %v381 = vpop.permute.xlu0 %380
    %382 = vrot.lane.b32.xlu0 %v377, 51
    %v383 = vpop.permute.xlu0 %382
    %vm384 = vcmask 416768
    %v385 = vsel %vm384, %v381, %v383
    %v389 = vsel %vm384, 0.0, %v381
    %v390 = vsel %vm384, %v383, 0.0
    %v391 = vld [vmem:[#allocation6] sm:$0xff]
    %393 = vst [vmem:[#allocation1] ss:$2 sm:$0xff] %v391
    %v394 = vld.sshfl [vmem:[#allocation1] sm:$0xff pattern:$0x75316420]
    %v395 = vld.sshfl [vmem:[#allocation1 + $0x8] sm:$0xff pattern:$0x75316420]
    %v398 = vmul.f32 %v389, %v394
    %v399 = vmul.f32 %v385, %v395
    %v400 = vadd.f32 %v398, 0.0
    %v401 = vadd.f32 %v399, 0.0
    %s402 = scalar_lea.vmem [#allocation6], 8
    %v403 = vld [vmem:[%s402] sm:$0xff]
    %405 = vst [vmem:[#allocation1] ss:$2 sm:$0xff] %v403
    %v406 = vld.sshfl [vmem:[#allocation1] sm:$0xff pattern:$0x75316420]
    %v407 = vld.sshfl [vmem:[#allocation1 + $0x8] sm:$0xff pattern:$0x75316420]
    %408 = vrot.lane.b32.xlu0 %v406, 1
    %v409 = vpop.permute.xlu0 %408
    %410 = vrot.lane.b32.xlu0 %v407, 1
    %v411 = vpop.permute.xlu0 %410
    %vm412 = vcmask 7168
    %v413 = vsel %vm412, %v409, %v411
    %v417 = vmul.f32 %v389, %v409
    %v418 = vmul.f32 %v385, %v413
    %v419 = vmul.f32 %v390, %v411
    %423 = vrot.lane.b32.xlu0 %v417, 127
    %v424 = vpop.permute.xlu0 %423
    %425 = vrot.lane.b32.xlu0 %v418, 127
    %v426 = vpop.permute.xlu0 %425
    %427 = vrot.lane.b32.xlu0 %v419, 127
    %v428 = vpop.permute.xlu0 %427
    %vm429 = vcmask 1039360
    %v430 = vsel %vm429, %v424, %v426
    %v431 = vsel %vm429, %v426, %v428
    %v434 = vadd.f32 %v400, %v430
    %v435 = vadd.f32 %v401, %v431
    %s436 = scalar_lea.vmem [#allocation6], 16
    %v437 = vld [vmem:[%s436] sm:$0xff]
    %439 = vst [vmem:[#allocation1] ss:$2 sm:$0xff] %v437
    %v440 = vld.sshfl [vmem:[#allocation1] sm:$0xff pattern:$0x75316420]
    %v441 = vld.sshfl [vmem:[#allocation1 + $0x8] sm:$0xff pattern:$0x75316420]
    %442 = vrot.lane.b32.xlu0 %v440, 2
    %v443 = vpop.permute.xlu0 %442
    %444 = vrot.lane.b32.xlu0 %v441, 2
    %v445 = vpop.permute.xlu0 %444
    %vm446 = vcmask 15360
    %v447 = vsel %vm446, %v443, %v445
    %v451 = vmul.f32 %v389, %v443
    %v452 = vmul.f32 %v385, %v447
    %v453 = vmul.f32 %v390, %v445
    %457 = vrot.lane.b32.xlu0 %v451, 126
    %v458 = vpop.permute.xlu0 %457
    %459 = vrot.lane.b32.xlu0 %v452, 126
    %v460 = vpop.permute.xlu0 %459
    %461 = vrot.lane.b32.xlu0 %v453, 126
    %v462 = vpop.permute.xlu0 %461
    %vm463 = vcmask 1031168
    %v464 = vsel %vm463, %v458, %v460
    %v465 = vsel %vm463, %v460, %v462
    %v468 = vadd.f32 %v434, %v464
    %v469 = vadd.f32 %v435, %v465
    %s470 = scalar_lea.vmem [#allocation6], 24
    %v471 = vld [vmem:[%s470] sm:$0xff]
    %473 = vst [vmem:[#allocation1] ss:$2 sm:$0xff] %v471
    %v474 = vld.sshfl [vmem:[#allocation1] sm:$0xff pattern:$0x75316420]
    %v475 = vld.sshfl [vmem:[#allocation1 + $0x8] sm:$0xff pattern:$0x75316420]
    %476 = vrot.lane.b32.xlu0 %v474, 3
    %v477 = vpop.permute.xlu0 %476
    %478 = vrot.lane.b32.xlu0 %v475, 3
    %v479 = vpop.permute.xlu0 %478
    %vm480 = vcmask 23552
    %v481 = vsel %vm480, %v477, %v479
    %v485 = vmul.f32 %v389, %v477
    %v486 = vmul.f32 %v385, %v481
    %v487 = vmul.f32 %v390, %v479
    %491 = vrot.lane.b32.xlu0 %v485, 125
    %v492 = vpop.permute.xlu0 %491
    %493 = vrot.lane.b32.xlu0 %v486, 125
    %v494 = vpop.permute.xlu0 %493
    %495 = vrot.lane.b32.xlu0 %v487, 125
    %v496 = vpop.permute.xlu0 %495
    %vm497 = vcmask 1022976
    %v498 = vsel %vm497, %v492, %v494
    %v499 = vsel %vm497, %v494, %v496
    %v502 = vadd.f32 %v468, %v498
    %v503 = vadd.f32 %v469, %v499
    %s504 = scalar_lea.vmem [#allocation6], 32
    %v505 = vld [vmem:[%s504] sm:$0xff]
    %507 = vst [vmem:[#allocation1] ss:$2 sm:$0xff] %v505
    %v508 = vld.sshfl [vmem:[#allocation1] sm:$0xff pattern:$0x75316420]
    %v509 = vld.sshfl [vmem:[#allocation1 + $0x8] sm:$0xff pattern:$0x75316420]
    %510 = vrot.lane.b32.xlu0 %v508, 4
    %v511 = vpop.permute.xlu0 %510
    %512 = vrot.lane.b32.xlu0 %v509, 4
    %v513 = vpop.permute.xlu0 %512
    %v514 = vsel %vm215, %v511, %v513
    %v518 = vmul.f32 %v389, %v511
    %v519 = vmul.f32 %v385, %v514
    %v520 = vmul.f32 %v390, %v513
    %524 = vrot.lane.b32.xlu0 %v518, 124
    %v525 = vpop.permute.xlu0 %524
    %526 = vrot.lane.b32.xlu0 %v519, 124
    %v527 = vpop.permute.xlu0 %526
    %528 = vrot.lane.b32.xlu0 %v520, 124
    %v529 = vpop.permute.xlu0 %528
    %vm530 = vcmask 1014784
    %v531 = vsel %vm530, %v525, %v527
    %v532 = vsel %vm530, %v527, %v529
    %v535 = vadd.f32 %v502, %v531
    %v536 = vadd.f32 %v503, %v532
    %s537 = scalar_lea.vmem [#allocation6], 40
    %v538 = vld [vmem:[%s537] sm:$0xff]
    %540 = vst [vmem:[#allocation1] ss:$2 sm:$0xff] %v538
    %v541 = vld.sshfl [vmem:[#allocation1] sm:$0xff pattern:$0x75316420]
    %v542 = vld.sshfl [vmem:[#allocation1 + $0x8] sm:$0xff pattern:$0x75316420]
    %543 = vrot.lane.b32.xlu0 %v541, 5
    %v544 = vpop.permute.xlu0 %543
    %545 = vrot.lane.b32.xlu0 %v542, 5
    %v546 = vpop.permute.xlu0 %545
    %vm547 = vcmask 39936
    %v548 = vsel %vm547, %v544, %v546
    %v552 = vmul.f32 %v389, %v544
    %v553 = vmul.f32 %v385, %v548
    %v554 = vmul.f32 %v390, %v546
    %558 = vrot.lane.b32.xlu0 %v552, 123
    %v559 = vpop.permute.xlu0 %558
    %560 = vrot.lane.b32.xlu0 %v553, 123
    %v561 = vpop.permute.xlu0 %560
    %562 = vrot.lane.b32.xlu0 %v554, 123
    %v563 = vpop.permute.xlu0 %562
    %vm564 = vcmask 1006592
    %v565 = vsel %vm564, %v559, %v561
    %v566 = vsel %vm564, %v561, %v563
    %v569 = vadd.f32 %v535, %v565
    %v570 = vadd.f32 %v536, %v566
    %s571 = scalar_lea.vmem [#allocation6], 48
    %v572 = vld [vmem:[%s571] sm:$0xff]
    %574 = vst [vmem:[#allocation1] ss:$2 sm:$0xff] %v572
    %v575 = vld.sshfl [vmem:[#allocation1] sm:$0xff pattern:$0x75316420]
    %v576 = vld.sshfl [vmem:[#allocation1 + $0x8] sm:$0xff pattern:$0x75316420]
    %577 = vrot.lane.b32.xlu0 %v575, 6
    %v578 = vpop.permute.xlu0 %577
    %579 = vrot.lane.b32.xlu0 %v576, 6
    %v580 = vpop.permute.xlu0 %579
    %vm581 = vcmask 48128
    %v582 = vsel %vm581, %v578, %v580
    %v586 = vmul.f32 %v389, %v578
    %v587 = vmul.f32 %v385, %v582
    %v588 = vmul.f32 %v390, %v580
    %592 = vrot.lane.b32.xlu0 %v586, 122
    %v593 = vpop.permute.xlu0 %592
    %594 = vrot.lane.b32.xlu0 %v587, 122
    %v595 = vpop.permute.xlu0 %594
    %596 = vrot.lane.b32.xlu0 %v588, 122
    %v597 = vpop.permute.xlu0 %596
    %vm598 = vcmask 998400
    %v599 = vsel %vm598, %v593, %v595
    %v600 = vsel %vm598, %v595, %v597
    %v603 = vadd.f32 %v569, %v599
    %v604 = vadd.f32 %v570, %v600
    %s605 = scalar_lea.vmem [#allocation6], 56
    %v606 = vld [vmem:[%s605] sm:$0xff]
    %608 = vst [vmem:[#allocation1] ss:$2 sm:$0xff] %v606
    %v609 = vld.sshfl [vmem:[#allocation1] sm:$0xff pattern:$0x75316420]
    %v610 = vld.sshfl [vmem:[#allocation1 + $0x8] sm:$0xff pattern:$0x75316420]
    %611 = vrot.lane.b32.xlu0 %v609, 16
    %v612 = vpop.permute.xlu0 %611
    %613 = vrot.lane.b32.xlu0 %v610, 16
    %v614 = vpop.permute.xlu0 %613
    %v615 = vsel %vm146, %v612, %v614
    %v619 = vmul.f32 %v389, %v612
    %v620 = vmul.f32 %v385, %v615
    %v621 = vmul.f32 %v390, %v614
    %625 = vrot.lane.b32.xlu0 %v619, 112
    %v626 = vpop.permute.xlu0 %625
    %627 = vrot.lane.b32.xlu0 %v620, 112
    %v628 = vpop.permute.xlu0 %627
    %629 = vrot.lane.b32.xlu0 %v621, 112
    %v630 = vpop.permute.xlu0 %629
    %vm631 = vcmask 916480
    %v632 = vsel %vm631, %v626, %v628
    %v633 = vsel %vm631, %v628, %v630
    %v636 = vadd.f32 %v603, %v632
    %v637 = vadd.f32 %v604, %v633
    %s638 = scalar_lea.vmem [#allocation6], 64
    %v639 = vld [vmem:[%s638] sm:$0xff]
    %641 = vst [vmem:[#allocation1] ss:$2 sm:$0xff] %v639
    %v642 = vld.sshfl [vmem:[#allocation1] sm:$0xff pattern:$0x75316420]
    %v643 = vld.sshfl [vmem:[#allocation1 + $0x8] sm:$0xff pattern:$0x75316420]
    %644 = vrot.lane.b32.xlu0 %v642, 17
    %v645 = vpop.permute.xlu0 %644
    %646 = vrot.lane.b32.xlu0 %v643, 17
    %v647 = vpop.permute.xlu0 %646
    %vm648 = vcmask 138240
    %v649 = vsel %vm648, %v645, %v647
    %v653 = vmul.f32 %v389, %v645
    %v654 = vmul.f32 %v385, %v649
    %v655 = vmul.f32 %v390, %v647
    %659 = vrot.lane.b32.xlu0 %v653, 111
    %v660 = vpop.permute.xlu0 %659
    %661 = vrot.lane.b32.xlu0 %v654, 111
    %v662 = vpop.permute.xlu0 %661
    %663 = vrot.lane.b32.xlu0 %v655, 111
    %v664 = vpop.permute.xlu0 %663
    %vm665 = vcmask 908288
    %v666 = vsel %vm665, %v660, %v662
    %v667 = vsel %vm665, %v662, %v664
    %v670 = vadd.f32 %v636, %v666
    %v671 = vadd.f32 %v637, %v667
    %s672 = scalar_lea.vmem [#allocation6], 72
    %v673 = vld [vmem:[%s672] sm:$0xff]
    %675 = vst [vmem:[#allocation1] ss:$2 sm:$0xff] %v673
    %v676 = vld.sshfl [vmem:[#allocation1] sm:$0xff pattern:$0x75316420]
    %v677 = vld.sshfl [vmem:[#allocation1 + $0x8] sm:$0xff pattern:$0x75316420]
    %678 = vrot.lane.b32.xlu0 %v676, 18
    %v679 = vpop.permute.xlu0 %678
    %680 = vrot.lane.b32.xlu0 %v677, 18
    %v681 = vpop.permute.xlu0 %680
    %vm682 = vcmask 146432
    %v683 = vsel %vm682, %v679, %v681
    %v687 = vmul.f32 %v389, %v679
    %v688 = vmul.f32 %v385, %v683
    %v689 = vmul.f32 %v390, %v681
    %693 = vrot.lane.b32.xlu0 %v687, 110
    %v694 = vpop.permute.xlu0 %693
    %695 = vrot.lane.b32.xlu0 %v688, 110
    %v696 = vpop.permute.xlu0 %695
    %697 = vrot.lane.b32.xlu0 %v689, 110
    %v698 = vpop.permute.xlu0 %697
    %vm699 = vcmask 900096
    %v700 = vsel %vm699, %v694, %v696
    %v701 = vsel %vm699, %v696, %v698
    %v704 = vadd.f32 %v670, %v700
    %v705 = vadd.f32 %v671, %v701
    %s706 = scalar_lea.vmem [#allocation6], 80
    %v707 = vld [vmem:[%s706] sm:$0xff]
    %709 = vst [vmem:[#allocation1] ss:$2 sm:$0xff] %v707
    %v710 = vld.sshfl [vmem:[#allocation1] sm:$0xff pattern:$0x75316420]
    %v711 = vld.sshfl [vmem:[#allocation1 + $0x8] sm:$0xff pattern:$0x75316420]
    %712 = vrot.lane.b32.xlu0 %v710, 19
    %v713 = vpop.permute.xlu0 %712
    %714 = vrot.lane.b32.xlu0 %v711, 19
    %v715 = vpop.permute.xlu0 %714
    %vm716 = vcmask 154624
    %v717 = vsel %vm716, %v713, %v715
    %v721 = vmul.f32 %v389, %v713
    %v722 = vmul.f32 %v385, %v717
    %v723 = vmul.f32 %v390, %v715
    %727 = vrot.lane.b32.xlu0 %v721, 109
    %v728 = vpop.permute.xlu0 %727
    %729 = vrot.lane.b32.xlu0 %v722, 109
    %v730 = vpop.permute.xlu0 %729
    %731 = vrot.lane.b32.xlu0 %v723, 109
    %v732 = vpop.permute.xlu0 %731
    %vm733 = vcmask 891904
    %v734 = vsel %vm733, %v728, %v730
    %v735 = vsel %vm733, %v730, %v732
    %v738 = vadd.f32 %v704, %v734
    %v739 = vadd.f32 %v705, %v735
    %s740 = scalar_lea.vmem [#allocation6], 88
    %v741 = vld [vmem:[%s740] sm:$0xff]
    %743 = vst [vmem:[#allocation1] ss:$2 sm:$0xff] %v741
    %v744 = vld.sshfl [vmem:[#allocation1] sm:$0xff pattern:$0x75316420]
    %v745 = vld.sshfl [vmem:[#allocation1 + $0x8] sm:$0xff pattern:$0x75316420]
    %746 = vrot.lane.b32.xlu0 %v744, 20
    %v747 = vpop.permute.xlu0 %746
    %748 = vrot.lane.b32.xlu0 %v745, 20
    %v749 = vpop.permute.xlu0 %748
    %vm750 = vcmask 162816
    %v751 = vsel %vm750, %v747, %v749
    %v755 = vmul.f32 %v389, %v747
    %v756 = vmul.f32 %v385, %v751
    %v757 = vmul.f32 %v390, %v749
    %761 = vrot.lane.b32.xlu0 %v755, 108
    %v762 = vpop.permute.xlu0 %761
    %763 = vrot.lane.b32.xlu0 %v756, 108
    %v764 = vpop.permute.xlu0 %763
    %765 = vrot.lane.b32.xlu0 %v757, 108
    %v766 = vpop.permute.xlu0 %765
    %vm767 = vcmask 883712
    %v768 = vsel %vm767, %v762, %v764
    %v769 = vsel %vm767, %v764, %v766
    %v772 = vadd.f32 %v738, %v768
    %v773 = vadd.f32 %v739, %v769
    %s774 = scalar_lea.vmem [#allocation6], 96
    %v775 = vld [vmem:[%s774] sm:$0xff]
    %777 = vst [vmem:[#allocation1] ss:$2 sm:$0xff] %v775
    %v778 = vld.sshfl [vmem:[#allocation1] sm:$0xff pattern:$0x75316420]
    %v779 = vld.sshfl [vmem:[#allocation1 + $0x8] sm:$0xff pattern:$0x75316420]
    %780 = vrot.lane.b32.xlu0 %v778, 21
    %v781 = vpop.permute.xlu0 %780
    %782 = vrot.lane.b32.xlu0 %v779, 21
    %v783 = vpop.permute.xlu0 %782
    %vm784 = vcmask 171008
    %v785 = vsel %vm784, %v781, %v783
    %v789 = vmul.f32 %v389, %v781
    %v790 = vmul.f32 %v385, %v785
    %v791 = vmul.f32 %v390, %v783
    %795 = vrot.lane.b32.xlu0 %v789, 107
    %v796 = vpop.permute.xlu0 %795
    %797 = vrot.lane.b32.xlu0 %v790, 107
    %v798 = vpop.permute.xlu0 %797
    %799 = vrot.lane.b32.xlu0 %v791, 107
    %v800 = vpop.permute.xlu0 %799
    %vm801 = vcmask 875520
    %v802 = vsel %vm801, %v796, %v798
    %v803 = vsel %vm801, %v798, %v800
    %v806 = vadd.f32 %v772, %v802
    %v807 = vadd.f32 %v773, %v803
    %s808 = scalar_lea.vmem [#allocation6], 104
    %v809 = vld [vmem:[%s808] sm:$0xff]
    %811 = vst [vmem:[#allocation1] ss:$2 sm:$0xff] %v809
    %v812 = vld.sshfl [vmem:[#allocation1] sm:$0xff pattern:$0x75316420]
    %v813 = vld.sshfl [vmem:[#allocation1 + $0x8] sm:$0xff pattern:$0x75316420]
    %814 = vrot.lane.b32.xlu0 %v812, 22
    %v815 = vpop.permute.xlu0 %814
    %816 = vrot.lane.b32.xlu0 %v813, 22
    %v817 = vpop.permute.xlu0 %816
    %vm818 = vcmask 179200
    %v819 = vsel %vm818, %v815, %v817
    %v823 = vmul.f32 %v389, %v815
    %v824 = vmul.f32 %v385, %v819
    %v825 = vmul.f32 %v390, %v817
    %829 = vrot.lane.b32.xlu0 %v823, 106
    %v830 = vpop.permute.xlu0 %829
    %831 = vrot.lane.b32.xlu0 %v824, 106
    %v832 = vpop.permute.xlu0 %831
    %833 = vrot.lane.b32.xlu0 %v825, 106
    %v834 = vpop.permute.xlu0 %833
    %vm835 = vcmask 867328
    %v836 = vsel %vm835, %v830, %v832
    %v837 = vsel %vm835, %v832, %v834
    %v840 = vadd.f32 %v806, %v836
    %v841 = vadd.f32 %v807, %v837
    %s842 = scalar_lea.vmem [#allocation6], 112
    %v843 = vld [vmem:[%s842] sm:$0xff]
    %845 = vst [vmem:[#allocation1] ss:$2 sm:$0xff] %v843
    %v846 = vld.sshfl [vmem:[#allocation1] sm:$0xff pattern:$0x75316420]
    %v847 = vld.sshfl [vmem:[#allocation1 + $0x8] sm:$0xff pattern:$0x75316420]
    %848 = vrot.lane.b32.xlu0 %v846, 32
    %v849 = vpop.permute.xlu0 %848
    %850 = vrot.lane.b32.xlu0 %v847, 32
    %v851 = vpop.permute.xlu0 %850
    %vm852 = vcmask 261120
    %v853 = vsel %vm852, %v849, %v851
    %v857 = vmul.f32 %v389, %v849
    %v858 = vmul.f32 %v385, %v853
    %v859 = vmul.f32 %v390, %v851
    %863 = vrot.lane.b32.xlu0 %v857, 96
    %v864 = vpop.permute.xlu0 %863
    %865 = vrot.lane.b32.xlu0 %v858, 96
    %v866 = vpop.permute.xlu0 %865
    %867 = vrot.lane.b32.xlu0 %v859, 96
    %v868 = vpop.permute.xlu0 %867
    %vm869 = vcmask 785408
    %v870 = vsel %vm869, %v864, %v866
    %v871 = vsel %vm869, %v866, %v868
    %v874 = vadd.f32 %v840, %v870
    %v875 = vadd.f32 %v841, %v871
    %s876 = scalar_lea.vmem [#allocation6], 120
    %v877 = vld [vmem:[%s876] sm:$0xff]
    %879 = vst [vmem:[#allocation1] ss:$2 sm:$0xff] %v877
    %v880 = vld.sshfl [vmem:[#allocation1] sm:$0xff pattern:$0x75316420]
    %v881 = vld.sshfl [vmem:[#allocation1 + $0x8] sm:$0xff pattern:$0x75316420]
    %882 = vrot.lane.b32.xlu0 %v880, 33
    %v883 = vpop.permute.xlu0 %882
    %884 = vrot.lane.b32.xlu0 %v881, 33
    %v885 = vpop.permute.xlu0 %884
    %vm886 = vcmask 269312
    %v887 = vsel %vm886, %v883, %v885
    %v891 = vmul.f32 %v389, %v883
    %v892 = vmul.f32 %v385, %v887
    %v893 = vmul.f32 %v390, %v885
    %897 = vrot.lane.b32.xlu0 %v891, 95
    %v898 = vpop.permute.xlu0 %897
    %899 = vrot.lane.b32.xlu0 %v892, 95
    %v900 = vpop.permute.xlu0 %899
    %901 = vrot.lane.b32.xlu0 %v893, 95
    %v902 = vpop.permute.xlu0 %901
    %vm903 = vcmask 777216
    %v904 = vsel %vm903, %v898, %v900
    %v905 = vsel %vm903, %v900, %v902
    %v908 = vadd.f32 %v874, %v904
    %v909 = vadd.f32 %v875, %v905
    %s910 = scalar_lea.vmem [#allocation6], 128
    %v911 = vld [vmem:[%s910] sm:$0xff]
    %913 = vst [vmem:[#allocation1] ss:$2 sm:$0xff] %v911
    %v914 = vld.sshfl [vmem:[#allocation1] sm:$0xff pattern:$0x75316420]
    %v915 = vld.sshfl [vmem:[#allocation1 + $0x8] sm:$0xff pattern:$0x75316420]
    %916 = vrot.lane.b32.xlu0 %v914, 34
    %v917 = vpop.permute.xlu0 %916
    %918 = vrot.lane.b32.xlu0 %v915, 34
    %v919 = vpop.permute.xlu0 %918
    %vm920 = vcmask 277504
    %v921 = vsel %vm920, %v917, %v919
    %v925 = vmul.f32 %v389, %v917
    %v926 = vmul.f32 %v385, %v921
    %v927 = vmul.f32 %v390, %v919
    %931 = vrot.lane.b32.xlu0 %v925, 94
    %v932 = vpop.permute.xlu0 %931
    %933 = vrot.lane.b32.xlu0 %v926, 94
    %v934 = vpop.permute.xlu0 %933
    %935 = vrot.lane.b32.xlu0 %v927, 94
    %v936 = vpop.permute.xlu0 %935
    %vm937 = vcmask 769024
    %v938 = vsel %vm937, %v932, %v934
    %v939 = vsel %vm937, %v934, %v936
    %v942 = vadd.f32 %v908, %v938
    %v943 = vadd.f32 %v909, %v939
    %s944 = scalar_lea.vmem [#allocation6], 136
    %v945 = vld [vmem:[%s944] sm:$0xff]
    %947 = vst [vmem:[#allocation1] ss:$2 sm:$0xff] %v945
    %v948 = vld.sshfl [vmem:[#allocation1] sm:$0xff pattern:$0x75316420]
    %v949 = vld.sshfl [vmem:[#allocation1 + $0x8] sm:$0xff pattern:$0x75316420]
    %950 = vrot.lane.b32.xlu0 %v948, 35
    %v951 = vpop.permute.xlu0 %950
    %952 = vrot.lane.b32.xlu0 %v949, 35
    %v953 = vpop.permute.xlu0 %952
    %vm954 = vcmask 285696
    %v955 = vsel %vm954, %v951, %v953
    %v959 = vmul.f32 %v389, %v951
    %v960 = vmul.f32 %v385, %v955
    %v961 = vmul.f32 %v390, %v953
    %965 = vrot.lane.b32.xlu0 %v959, 93
    %v966 = vpop.permute.xlu0 %965
    %967 = vrot.lane.b32.xlu0 %v960, 93
    %v968 = vpop.permute.xlu0 %967
    %969 = vrot.lane.b32.xlu0 %v961, 93
    %v970 = vpop.permute.xlu0 %969
    %vm971 = vcmask 760832
    %v972 = vsel %vm971, %v966, %v968
    %v973 = vsel %vm971, %v968, %v970
    %v976 = vadd.f32 %v942, %v972
    %v977 = vadd.f32 %v943, %v973
    %s978 = scalar_lea.vmem [#allocation6], 144
    %v979 = vld [vmem:[%s978] sm:$0xff]
    %981 = vst [vmem:[#allocation1] ss:$2 sm:$0xff] %v979
    %v982 = vld.sshfl [vmem:[#allocation1] sm:$0xff pattern:$0x75316420]
    %v983 = vld.sshfl [vmem:[#allocation1 + $0x8] sm:$0xff pattern:$0x75316420]
    %984 = vrot.lane.b32.xlu0 %v982, 36
    %v985 = vpop.permute.xlu0 %984
    %986 = vrot.lane.b32.xlu0 %v983, 36
    %v987 = vpop.permute.xlu0 %986
    %vm988 = vcmask 293888
    %v989 = vsel %vm988, %v985, %v987
    %v993 = vmul.f32 %v389, %v985
    %v994 = vmul.f32 %v385, %v989
    %v995 = vmul.f32 %v390, %v987
    %999 = vrot.lane.b32.xlu0 %v993, 92
    %v1000 = vpop.permute.xlu0 %999
    %1001 = vrot.lane.b32.xlu0 %v994, 92
    %v1002 = vpop.permute.xlu0 %1001
    %1003 = vrot.lane.b32.xlu0 %v995, 92
    %v1004 = vpop.permute.xlu0 %1003
    %vm1005 = vcmask 752640
    %v1006 = vsel %vm1005, %v1000, %v1002
    %v1007 = vsel %vm1005, %v1002, %v1004
    %v1010 = vadd.f32 %v976, %v1006
    %v1011 = vadd.f32 %v977, %v1007
    %s1012 = scalar_lea.vmem [#allocation6], 152
    %v1013 = vld [vmem:[%s1012] sm:$0xff]
    %1015 = vst [vmem:[#allocation1] ss:$2 sm:$0xff] %v1013
    %v1016 = vld.sshfl [vmem:[#allocation1] sm:$0xff pattern:$0x75316420]
    %v1017 = vld.sshfl [vmem:[#allocation1 + $0x8] sm:$0xff pattern:$0x75316420]
    %1018 = vrot.lane.b32.xlu0 %v1016, 37
    %v1019 = vpop.permute.xlu0 %1018
    %1020 = vrot.lane.b32.xlu0 %v1017, 37
    %v1021 = vpop.permute.xlu0 %1020
    %vm1022 = vcmask 302080
    %v1023 = vsel %vm1022, %v1019, %v1021
    %v1027 = vmul.f32 %v389, %v1019
    %v1028 = vmul.f32 %v385, %v1023
    %v1029 = vmul.f32 %v390, %v1021
    %1033 = vrot.lane.b32.xlu0 %v1027, 91
    %v1034 = vpop.permute.xlu0 %1033
    %1035 = vrot.lane.b32.xlu0 %v1028, 91
    %v1036 = vpop.permute.xlu0 %1035
    %1037 = vrot.lane.b32.xlu0 %v1029, 91
    %v1038 = vpop.permute.xlu0 %1037
    %vm1039 = vcmask 744448
    %v1040 = vsel %vm1039, %v1034, %v1036
    %v1041 = vsel %vm1039, %v1036, %v1038
    %v1044 = vadd.f32 %v1010, %v1040
    %v1045 = vadd.f32 %v1011, %v1041
    %s1046 = scalar_lea.vmem [#allocation6], 160
    %v1047 = vld [vmem:[%s1046] sm:$0xff]
    %1049 = vst [vmem:[#allocation1] ss:$2 sm:$0xff] %v1047
    %v1050 = vld.sshfl [vmem:[#allocation1] sm:$0xff pattern:$0x75316420]
    %v1051 = vld.sshfl [vmem:[#allocation1 + $0x8] sm:$0xff pattern:$0x75316420]
    %1052 = vrot.lane.b32.xlu0 %v1050, 38
    %v1053 = vpop.permute.xlu0 %1052
    %1054 = vrot.lane.b32.xlu0 %v1051, 38
    %v1055 = vpop.permute.xlu0 %1054
    %vm1056 = vcmask 310272
    %v1057 = vsel %vm1056, %v1053, %v1055
    %v1061 = vmul.f32 %v389, %v1053
    %v1062 = vmul.f32 %v385, %v1057
    %v1063 = vmul.f32 %v390, %v1055
    %1067 = vrot.lane.b32.xlu0 %v1061, 90
    %v1068 = vpop.permute.xlu0 %1067
    %1069 = vrot.lane.b32.xlu0 %v1062, 90
    %v1070 = vpop.permute.xlu0 %1069
    %1071 = vrot.lane.b32.xlu0 %v1063, 90
    %v1072 = vpop.permute.xlu0 %1071
    %vm1073 = vcmask 736256
    %v1074 = vsel %vm1073, %v1068, %v1070
    %v1075 = vsel %vm1073, %v1070, %v1072
    %v1078 = vadd.f32 %v1044, %v1074
    %v1079 = vadd.f32 %v1045, %v1075
    %s1080 = scalar_lea.vmem [#allocation6], 168
    %v1081 = vld [vmem:[%s1080] sm:$0xff]
    %1083 = vst [vmem:[#allocation1] ss:$2 sm:$0xff] %v1081
    %v1084 = vld.sshfl [vmem:[#allocation1] sm:$0xff pattern:$0x75316420]
    %v1085 = vld.sshfl [vmem:[#allocation1 + $0x8] sm:$0xff pattern:$0x75316420]
    %1086 = vrot.lane.b32.xlu0 %v1084, 48
    %v1087 = vpop.permute.xlu0 %1086
    %1088 = vrot.lane.b32.xlu0 %v1085, 48
    %v1089 = vpop.permute.xlu0 %1088
    %vm1090 = vcmask 392192
    %v1091 = vsel %vm1090, %v1087, %v1089
    %v1095 = vmul.f32 %v389, %v1087
    %v1096 = vmul.f32 %v385, %v1091
    %v1097 = vmul.f32 %v390, %v1089
    %1101 = vrot.lane.b32.xlu0 %v1095, 80
    %v1102 = vpop.permute.xlu0 %1101
    %1103 = vrot.lane.b32.xlu0 %v1096, 80
    %v1104 = vpop.permute.xlu0 %1103
    %1105 = vrot.lane.b32.xlu0 %v1097, 80
    %v1106 = vpop.permute.xlu0 %1105
    %vm1107 = vcmask 654336
    %v1108 = vsel %vm1107, %v1102, %v1104
    %v1109 = vsel %vm1107, %v1104, %v1106
    %v1112 = vadd.f32 %v1078, %v1108
    %v1113 = vadd.f32 %v1079, %v1109
    %s1114 = scalar_lea.vmem [#allocation6], 176
    %v1115 = vld [vmem:[%s1114] sm:$0xff]
    %1117 = vst [vmem:[#allocation1] ss:$2 sm:$0xff] %v1115
    %v1118 = vld.sshfl [vmem:[#allocation1] sm:$0xff pattern:$0x75316420]
    %v1119 = vld.sshfl [vmem:[#allocation1 + $0x8] sm:$0xff pattern:$0x75316420]
    %1120 = vrot.lane.b32.xlu0 %v1118, 49
    %v1121 = vpop.permute.xlu0 %1120
    %1122 = vrot.lane.b32.xlu0 %v1119, 49
    %v1123 = vpop.permute.xlu0 %1122
    %vm1124 = vcmask 400384
    %v1125 = vsel %vm1124, %v1121, %v1123
    %v1129 = vmul.f32 %v389, %v1121
    %v1130 = vmul.f32 %v385, %v1125
    %v1131 = vmul.f32 %v390, %v1123
    %1135 = vrot.lane.b32.xlu0 %v1129, 79
    %v1136 = vpop.permute.xlu0 %1135
    %1137 = vrot.lane.b32.xlu0 %v1130, 79
    %v1138 = vpop.permute.xlu0 %1137
    %1139 = vrot.lane.b32.xlu0 %v1131, 79
    %v1140 = vpop.permute.xlu0 %1139
    %vm1141 = vcmask 646144
    %v1142 = vsel %vm1141, %v1136, %v1138
    %v1143 = vsel %vm1141, %v1138, %v1140
    %v1146 = vadd.f32 %v1112, %v1142
    %v1147 = vadd.f32 %v1113, %v1143
    %s1148 = scalar_lea.vmem [#allocation6], 184
    %v1149 = vld [vmem:[%s1148] sm:$0xff]
    %1151 = vst [vmem:[#allocation1] ss:$2 sm:$0xff] %v1149
    %v1152 = vld.sshfl [vmem:[#allocation1] sm:$0xff pattern:$0x75316420]
    %v1153 = vld.sshfl [vmem:[#allocation1 + $0x8] sm:$0xff pattern:$0x75316420]
    %1154 = vrot.lane.b32.xlu0 %v1152, 50
    %v1155 = vpop.permute.xlu0 %1154
    %1156 = vrot.lane.b32.xlu0 %v1153, 50
    %v1157 = vpop.permute.xlu0 %1156
    %vm1158 = vcmask 408576
    %v1159 = vsel %vm1158, %v1155, %v1157
    %v1163 = vmul.f32 %v389, %v1155
    %v1164 = vmul.f32 %v385, %v1159
    %v1165 = vmul.f32 %v390, %v1157
    %1169 = vrot.lane.b32.xlu0 %v1163, 78
    %v1170 = vpop.permute.xlu0 %1169
    %1171 = vrot.lane.b32.xlu0 %v1164, 78
    %v1172 = vpop.permute.xlu0 %1171
    %1173 = vrot.lane.b32.xlu0 %v1165, 78
    %v1174 = vpop.permute.xlu0 %1173
    %vm1175 = vcmask 637952
    %v1176 = vsel %vm1175, %v1170, %v1172
    %v1177 = vsel %vm1175, %v1172, %v1174
    %v1180 = vadd.f32 %v1146, %v1176
    %v1181 = vadd.f32 %v1147, %v1177
    %s1182 = scalar_lea.vmem [#allocation6], 192
    %v1183 = vld [vmem:[%s1182] sm:$0xff]
    %1185 = vst [vmem:[#allocation1] ss:$2 sm:$0xff] %v1183
    %v1186 = vld.sshfl [vmem:[#allocation1] sm:$0xff pattern:$0x75316420]
    %v1187 = vld.sshfl [vmem:[#allocation1 + $0x8] sm:$0xff pattern:$0x75316420]
    %1188 = vrot.lane.b32.xlu0 %v1186, 51
    %v1189 = vpop.permute.xlu0 %1188
    %1190 = vrot.lane.b32.xlu0 %v1187, 51
    %v1191 = vpop.permute.xlu0 %1190
    %v1192 = vsel %vm384, %v1189, %v1191
    %v1196 = vmul.f32 %v389, %v1189
    %v1197 = vmul.f32 %v385, %v1192
    %v1198 = vmul.f32 %v390, %v1191
    %1202 = vrot.lane.b32.xlu0 %v1196, 77
    %v1203 = vpop.permute.xlu0 %1202
    %1204 = vrot.lane.b32.xlu0 %v1197, 77
    %v1205 = vpop.permute.xlu0 %1204
    %1206 = vrot.lane.b32.xlu0 %v1198, 77
    %v1207 = vpop.permute.xlu0 %1206
    %vm1208 = vcmask 629760
    %v1209 = vsel %vm1208, %v1203, %v1205
    %v1210 = vsel %vm1208, %v1205, %v1207
    %v1213 = vadd.f32 %v1180, %v1209
    %v1214 = vadd.f32 %v1181, %v1210
    %s1215 = scalar_lea.vmem [#allocation6], 200
    %v1216 = vld [vmem:[%s1215] sm:$0xff]
    %1218 = vst [vmem:[#allocation1] ss:$2 sm:$0xff] %v1216
    %v1219 = vld.sshfl [vmem:[#allocation1] sm:$0xff pattern:$0x75316420]
    %v1220 = vld.sshfl [vmem:[#allocation1 + $0x8] sm:$0xff pattern:$0x75316420]
    %1221 = vrot.lane.b32.xlu0 %v1219, 52
    %v1222 = vpop.permute.xlu0 %1221
    %1223 = vrot.lane.b32.xlu0 %v1220, 52
    %v1224 = vpop.permute.xlu0 %1223
    %vm1225 = vcmask 424960
    %v1226 = vsel %vm1225, %v1222, %v1224
    %v1230 = vmul.f32 %v389, %v1222
    %v1231 = vmul.f32 %v385, %v1226
    %v1232 = vmul.f32 %v390, %v1224
    %1236 = vrot.lane.b32.xlu0 %v1230, 76
    %v1237 = vpop.permute.xlu0 %1236
    %1238 = vrot.lane.b32.xlu0 %v1231, 76
    %v1239 = vpop.permute.xlu0 %1238
    %1240 = vrot.lane.b32.xlu0 %v1232, 76
    %v1241 = vpop.permute.xlu0 %1240
    %vm1242 = vcmask 621568
    %v1243 = vsel %vm1242, %v1237, %v1239
    %v1244 = vsel %vm1242, %v1239, %v1241
    %v1247 = vadd.f32 %v1213, %v1243
    %v1248 = vadd.f32 %v1214, %v1244
    %s1249 = scalar_lea.vmem [#allocation6], 208
    %v1250 = vld [vmem:[%s1249] sm:$0xff]
    %1252 = vst [vmem:[#allocation1] ss:$2 sm:$0xff] %v1250
    %v1253 = vld.sshfl [vmem:[#allocation1] sm:$0xff pattern:$0x75316420]
    %v1254 = vld.sshfl [vmem:[#allocation1 + $0x8] sm:$0xff pattern:$0x75316420]
    %1255 = vrot.lane.b32.xlu0 %v1253, 53
    %v1256 = vpop.permute.xlu0 %1255
    %1257 = vrot.lane.b32.xlu0 %v1254, 53
    %v1258 = vpop.permute.xlu0 %1257
    %vm1259 = vcmask 433152
    %v1260 = vsel %vm1259, %v1256, %v1258
    %v1264 = vmul.f32 %v389, %v1256
    %v1265 = vmul.f32 %v385, %v1260
    %v1266 = vmul.f32 %v390, %v1258
    %1270 = vrot.lane.b32.xlu0 %v1264, 75
    %v1271 = vpop.permute.xlu0 %1270
    %1272 = vrot.lane.b32.xlu0 %v1265, 75
    %v1273 = vpop.permute.xlu0 %1272
    %1274 = vrot.lane.b32.xlu0 %v1266, 75
    %v1275 = vpop.permute.xlu0 %1274
    %vm1276 = vcmask 613376
    %v1277 = vsel %vm1276, %v1271, %v1273
    %v1278 = vsel %vm1276, %v1273, %v1275
    %v1281 = vadd.f32 %v1247, %v1277
    %v1282 = vadd.f32 %v1248, %v1278
    %s1283 = scalar_lea.vmem [#allocation6], 216
    %v1284 = vld [vmem:[%s1283] sm:$0xff]
    %1286 = vst [vmem:[#allocation1] ss:$2 sm:$0xff] %v1284
    %v1287 = vld.sshfl [vmem:[#allocation1] sm:$0xff pattern:$0x75316420]
    %v1288 = vld.sshfl [vmem:[#allocation1 + $0x8] sm:$0xff pattern:$0x75316420]
    %1289 = vrot.lane.b32.xlu0 %v1287, 54
    %v1290 = vpop.permute.xlu0 %1289
    %1291 = vrot.lane.b32.xlu0 %v1288, 54
    %v1292 = vpop.permute.xlu0 %1291
    %vm1293 = vcmask 441344
    %v1294 = vsel %vm1293, %v1290, %v1292
    %v1298 = vmul.f32 %v389, %v1290
    %v1299 = vmul.f32 %v385, %v1294
    %v1300 = vmul.f32 %v390, %v1292
    %1304 = vrot.lane.b32.xlu0 %v1298, 74
    %v1305 = vpop.permute.xlu0 %1304
    %1306 = vrot.lane.b32.xlu0 %v1299, 74
    %v1307 = vpop.permute.xlu0 %1306
    %1308 = vrot.lane.b32.xlu0 %v1300, 74
    %v1309 = vpop.permute.xlu0 %1308
    %vm1310 = vcmask 605184
    %v1311 = vsel %vm1310, %v1305, %v1307
    %v1312 = vsel %vm1310, %v1307, %v1309
    %v1315 = vadd.f32 %v1281, %v1311
    %v1316 = vadd.f32 %v1282, %v1312
    %s1317 = scalar_lea.vmem [#allocation6], 224
    %v1318 = vld [vmem:[%s1317] sm:$0xff]
    %1320 = vst [vmem:[#allocation1] ss:$2 sm:$0xff] %v1318
    %v1321 = vld.sshfl [vmem:[#allocation1] sm:$0xff pattern:$0x75316420]
    %v1322 = vld.sshfl [vmem:[#allocation1 + $0x8] sm:$0xff pattern:$0x75316420]
    %1323 = vrot.lane.b32.xlu0 %v1321, 64
    %v1324 = vpop.permute.xlu0 %1323
    %1325 = vrot.lane.b32.xlu0 %v1322, 64
    %v1326 = vpop.permute.xlu0 %1325
    %vm1327 = vcmask 523264
    %v1328 = vsel %vm1327, %v1324, %v1326
    %v1332 = vmul.f32 %v389, %v1324
    %v1333 = vmul.f32 %v385, %v1328
    %v1334 = vmul.f32 %v390, %v1326
    %1338 = vrot.lane.b32.xlu0 %v1332, 64
    %v1339 = vpop.permute.xlu0 %1338
    %1340 = vrot.lane.b32.xlu0 %v1333, 64
    %v1341 = vpop.permute.xlu0 %1340
    %1342 = vrot.lane.b32.xlu0 %v1334, 64
    %v1343 = vpop.permute.xlu0 %1342
    %v1344 = vsel %vm1327, %v1339, %v1341
    %v1345 = vsel %vm1327, %v1341, %v1343
    %v1348 = vadd.f32 %v1315, %v1344
    %v1349 = vadd.f32 %v1316, %v1345
    %s1350 = scalar_lea.vmem [#allocation6], 232
    %v1351 = vld [vmem:[%s1350] sm:$0xff]
    %1353 = vst [vmem:[#allocation1] ss:$2 sm:$0xff] %v1351
    %v1354 = vld.sshfl [vmem:[#allocation1] sm:$0xff pattern:$0x75316420]
    %v1355 = vld.sshfl [vmem:[#allocation1 + $0x8] sm:$0xff pattern:$0x75316420]
    %1356 = vrot.lane.b32.xlu0 %v1354, 65
    %v1357 = vpop.permute.xlu0 %1356
    %1358 = vrot.lane.b32.xlu0 %v1355, 65
    %v1359 = vpop.permute.xlu0 %1358
    %vm1360 = vcmask 531456
    %v1361 = vsel %vm1360, %v1357, %v1359
    %v1365 = vmul.f32 %v389, %v1357
    %v1366 = vmul.f32 %v385, %v1361
    %v1367 = vmul.f32 %v390, %v1359
    %1371 = vrot.lane.b32.xlu0 %v1365, 63
    %v1372 = vpop.permute.xlu0 %1371
    %1373 = vrot.lane.b32.xlu0 %v1366, 63
    %v1374 = vpop.permute.xlu0 %1373
    %1375 = vrot.lane.b32.xlu0 %v1367, 63
    %v1376 = vpop.permute.xlu0 %1375
    %vm1377 = vcmask 515072
    %v1378 = vsel %vm1377, %v1372, %v1374
    %v1379 = vsel %vm1377, %v1374, %v1376
    %v1382 = vadd.f32 %v1348, %v1378
    %v1383 = vadd.f32 %v1349, %v1379
    %s1384 = scalar_lea.vmem [#allocation6], 240
    %v1385 = vld [vmem:[%s1384] sm:$0xff]
    %1387 = vst [vmem:[#allocation1] ss:$2 sm:$0xff] %v1385
    %v1388 = vld.sshfl [vmem:[#allocation1] sm:$0xff pattern:$0x75316420]
    %v1389 = vld.sshfl [vmem:[#allocation1 + $0x8] sm:$0xff pattern:$0x75316420]
    %1390 = vrot.lane.b32.xlu0 %v1388, 66
    %v1391 = vpop.permute.xlu0 %1390
    %1392 = vrot.lane.b32.xlu0 %v1389, 66
    %v1393 = vpop.permute.xlu0 %1392
    %vm1394 = vcmask 539648
    %v1395 = vsel %vm1394, %v1391, %v1393
    %v1399 = vmul.f32 %v389, %v1391
    %v1400 = vmul.f32 %v385, %v1395
    %v1401 = vmul.f32 %v390, %v1393
    %1405 = vrot.lane.b32.xlu0 %v1399, 62
    %v1406 = vpop.permute.xlu0 %1405
    %1407 = vrot.lane.b32.xlu0 %v1400, 62
    %v1408 = vpop.permute.xlu0 %1407
    %1409 = vrot.lane.b32.xlu0 %v1401, 62
    %v1410 = vpop.permute.xlu0 %1409
    %vm1411 = vcmask 506880
    %v1412 = vsel %vm1411, %v1406, %v1408
    %v1413 = vsel %vm1411, %v1408, %v1410
    %v1416 = vadd.f32 %v1382, %v1412
    %v1417 = vadd.f32 %v1383, %v1413
    %s1418 = scalar_lea.vmem [#allocation6], 248
    %v1419 = vld [vmem:[%s1418] sm:$0xff]
    %1421 = vst [vmem:[#allocation1] ss:$2 sm:$0xff] %v1419
    %v1422 = vld.sshfl [vmem:[#allocation1] sm:$0xff pattern:$0x75316420]
    %v1423 = vld.sshfl [vmem:[#allocation1 + $0x8] sm:$0xff pattern:$0x75316420]
    %1424 = vrot.lane.b32.xlu0 %v1422, 67
    %v1425 = vpop.permute.xlu0 %1424
    %1426 = vrot.lane.b32.xlu0 %v1423, 67
    %v1427 = vpop.permute.xlu0 %1426
    %vm1428 = vcmask 547840
    %v1429 = vsel %vm1428, %v1425, %v1427
    %v1433 = vmul.f32 %v389, %v1425
    %v1434 = vmul.f32 %v385, %v1429
    %v1435 = vmul.f32 %v390, %v1427
    %1439 = vrot.lane.b32.xlu0 %v1433, 61
    %v1440 = vpop.permute.xlu0 %1439
    %1441 = vrot.lane.b32.xlu0 %v1434, 61
    %v1442 = vpop.permute.xlu0 %1441
    %1443 = vrot.lane.b32.xlu0 %v1435, 61
    %v1444 = vpop.permute.xlu0 %1443
    %vm1445 = vcmask 498688
    %v1446 = vsel %vm1445, %v1440, %v1442
    %v1447 = vsel %vm1445, %v1442, %v1444
    %v1450 = vadd.f32 %v1416, %v1446
    %v1451 = vadd.f32 %v1417, %v1447
    %s1452 = scalar_lea.vmem [#allocation6], 256
    %v1453 = vld [vmem:[%s1452] sm:$0xff]
    %1455 = vst [vmem:[#allocation1] ss:$2 sm:$0xff] %v1453
    %v1456 = vld.sshfl [vmem:[#allocation1] sm:$0xff pattern:$0x75316420]
    %v1457 = vld.sshfl [vmem:[#allocation1 + $0x8] sm:$0xff pattern:$0x75316420]
    %1458 = vrot.lane.b32.xlu0 %v1456, 68
    %v1459 = vpop.permute.xlu0 %1458
    %1460 = vrot.lane.b32.xlu0 %v1457, 68
    %v1461 = vpop.permute.xlu0 %1460
    %vm1462 = vcmask 556032
    %v1463 = vsel %vm1462, %v1459, %v1461
    %v1467 = vmul.f32 %v389, %v1459
    %v1468 = vmul.f32 %v385, %v1463
    %v1469 = vmul.f32 %v390, %v1461
    %1473 = vrot.lane.b32.xlu0 %v1467, 60
    %v1474 = vpop.permute.xlu0 %1473
    %1475 = vrot.lane.b32.xlu0 %v1468, 60
    %v1476 = vpop.permute.xlu0 %1475
    %1477 = vrot.lane.b32.xlu0 %v1469, 60
    %v1478 = vpop.permute.xlu0 %1477
    %vm1479 = vcmask 490496
    %v1480 = vsel %vm1479, %v1474, %v1476
    %v1481 = vsel %vm1479, %v1476, %v1478
    %v1484 = vadd.f32 %v1450, %v1480
    %v1485 = vadd.f32 %v1451, %v1481
    %s1486 = scalar_lea.vmem [#allocation6], 264
    %v1487 = vld [vmem:[%s1486] sm:$0xff]
    %1489 = vst [vmem:[#allocation1] ss:$2 sm:$0xff] %v1487
    %v1490 = vld.sshfl [vmem:[#allocation1] sm:$0xff pattern:$0x75316420]
    %v1491 = vld.sshfl [vmem:[#allocation1 + $0x8] sm:$0xff pattern:$0x75316420]
    %1492 = vrot.lane.b32.xlu0 %v1490, 69
    %v1493 = vpop.permute.xlu0 %1492
    %1494 = vrot.lane.b32.xlu0 %v1491, 69
    %v1495 = vpop.permute.xlu0 %1494
    %vm1496 = vcmask 564224
    %v1497 = vsel %vm1496, %v1493, %v1495
    %v1501 = vmul.f32 %v389, %v1493
    %v1502 = vmul.f32 %v385, %v1497
    %v1503 = vmul.f32 %v390, %v1495
    %1507 = vrot.lane.b32.xlu0 %v1501, 59
    %v1508 = vpop.permute.xlu0 %1507
    %1509 = vrot.lane.b32.xlu0 %v1502, 59
    %v1510 = vpop.permute.xlu0 %1509
    %1511 = vrot.lane.b32.xlu0 %v1503, 59
    %v1512 = vpop.permute.xlu0 %1511
    %vm1513 = vcmask 482304
    %v1514 = vsel %vm1513, %v1508, %v1510
    %v1515 = vsel %vm1513, %v1510, %v1512
    %v1518 = vadd.f32 %v1484, %v1514
    %v1519 = vadd.f32 %v1485, %v1515
    %s1520 = scalar_lea.vmem [#allocation6], 272
    %v1521 = vld [vmem:[%s1520] sm:$0xff]
    %1523 = vst [vmem:[#allocation1] ss:$2 sm:$0xff] %v1521
    %v1524 = vld.sshfl [vmem:[#allocation1] sm:$0xff pattern:$0x75316420]
    %v1525 = vld.sshfl [vmem:[#allocation1 + $0x8] sm:$0xff pattern:$0x75316420]
    %1526 = vrot.lane.b32.xlu0 %v1524, 70
    %v1527 = vpop.permute.xlu0 %1526
    %1528 = vrot.lane.b32.xlu0 %v1525, 70
    %v1529 = vpop.permute.xlu0 %1528
    %vm1530 = vcmask 572416
    %v1531 = vsel %vm1530, %v1527, %v1529
    %v1535 = vmul.f32 %v389, %v1527
    %v1536 = vmul.f32 %v385, %v1531
    %v1537 = vmul.f32 %v390, %v1529
    %1541 = vrot.lane.b32.xlu0 %v1535, 58
    %v1542 = vpop.permute.xlu0 %1541
    %1543 = vrot.lane.b32.xlu0 %v1536, 58
    %v1544 = vpop.permute.xlu0 %1543
    %1545 = vrot.lane.b32.xlu0 %v1537, 58
    %v1546 = vpop.permute.xlu0 %1545
    %vm1547 = vcmask 474112
    %v1548 = vsel %vm1547, %v1542, %v1544
    %v1549 = vsel %vm1547, %v1544, %v1546
    %v1552 = vadd.f32 %v1518, %v1548
    %v1553 = vadd.f32 %v1519, %v1549
    %s1554 = scalar_lea.vmem [#allocation6], 280
    %v1555 = vld [vmem:[%s1554] sm:$0xff]
    %1557 = vst [vmem:[#allocation1] ss:$2 sm:$0xff] %v1555
    %v1558 = vld.sshfl [vmem:[#allocation1] sm:$0xff pattern:$0x75316420]
    %v1559 = vld.sshfl [vmem:[#allocation1 + $0x8] sm:$0xff pattern:$0x75316420]
    %1560 = vrot.lane.b32.xlu0 %v1558, 80
    %v1561 = vpop.permute.xlu0 %1560
    %1562 = vrot.lane.b32.xlu0 %v1559, 80
    %v1563 = vpop.permute.xlu0 %1562
    %v1564 = vsel %vm1107, %v1561, %v1563
    %v1568 = vmul.f32 %v389, %v1561
    %v1569 = vmul.f32 %v385, %v1564
    %v1570 = vmul.f32 %v390, %v1563
    %1574 = vrot.lane.b32.xlu0 %v1568, 48
    %v1575 = vpop.permute.xlu0 %1574
    %1576 = vrot.lane.b32.xlu0 %v1569, 48
    %v1577 = vpop.permute.xlu0 %1576
    %1578 = vrot.lane.b32.xlu0 %v1570, 48
    %v1579 = vpop.permute.xlu0 %1578
    %v1580 = vsel %vm1090, %v1575, %v1577
    %v1581 = vsel %vm1090, %v1577, %v1579
    %v1584 = vadd.f32 %v1552, %v1580
    %v1585 = vadd.f32 %v1553, %v1581
    %s1586 = scalar_lea.vmem [#allocation6], 288
    %v1587 = vld [vmem:[%s1586] sm:$0xff]
    %1589 = vst [vmem:[#allocation1] ss:$2 sm:$0xff] %v1587
    %v1590 = vld.sshfl [vmem:[#allocation1] sm:$0xff pattern:$0x75316420]
    %v1591 = vld.sshfl [vmem:[#allocation1 + $0x8] sm:$0xff pattern:$0x75316420]
    %1592 = vrot.lane.b32.xlu0 %v1590, 81
    %v1593 = vpop.permute.xlu0 %1592
    %1594 = vrot.lane.b32.xlu0 %v1591, 81
    %v1595 = vpop.permute.xlu0 %1594
    %vm1596 = vcmask 662528
    %v1597 = vsel %vm1596, %v1593, %v1595
    %v1601 = vmul.f32 %v389, %v1593
    %v1602 = vmul.f32 %v385, %v1597
    %v1603 = vmul.f32 %v390, %v1595
    %1607 = vrot.lane.b32.xlu0 %v1601, 47
    %v1608 = vpop.permute.xlu0 %1607
    %1609 = vrot.lane.b32.xlu0 %v1602, 47
    %v1610 = vpop.permute.xlu0 %1609
    %1611 = vrot.lane.b32.xlu0 %v1603, 47
    %v1612 = vpop.permute.xlu0 %1611
    %vm1613 = vcmask 384000
    %v1614 = vsel %vm1613, %v1608, %v1610
    %v1615 = vsel %vm1613, %v1610, %v1612
    %v1618 = vadd.f32 %v1584, %v1614
    %v1619 = vadd.f32 %v1585, %v1615
    %s1620 = scalar_lea.vmem [#allocation6], 296
    %v1621 = vld [vmem:[%s1620] sm:$0xff]
    %1623 = vst [vmem:[#allocation1] ss:$2 sm:$0xff] %v1621
    %v1624 = vld.sshfl [vmem:[#allocation1] sm:$0xff pattern:$0x75316420]
    %v1625 = vld.sshfl [vmem:[#allocation1 + $0x8] sm:$0xff pattern:$0x75316420]
    %1626 = vrot.lane.b32.xlu0 %v1624, 82
    %v1627 = vpop.permute.xlu0 %1626
    %1628 = vrot.lane.b32.xlu0 %v1625, 82
    %v1629 = vpop.permute.xlu0 %1628
    %vm1630 = vcmask 670720
    %v1631 = vsel %vm1630, %v1627, %v1629
    %v1635 = vmul.f32 %v389, %v1627
    %v1636 = vmul.f32 %v385, %v1631
    %v1637 = vmul.f32 %v390, %v1629
    %1641 = vrot.lane.b32.xlu0 %v1635, 46
    %v1642 = vpop.permute.xlu0 %1641
    %1643 = vrot.lane.b32.xlu0 %v1636, 46
    %v1644 = vpop.permute.xlu0 %1643
    %1645 = vrot.lane.b32.xlu0 %v1637, 46
    %v1646 = vpop.permute.xlu0 %1645
    %vm1647 = vcmask 375808
    %v1648 = vsel %vm1647, %v1642, %v1644
    %v1649 = vsel %vm1647, %v1644, %v1646
    %v1652 = vadd.f32 %v1618, %v1648
    %v1653 = vadd.f32 %v1619, %v1649
    %s1654 = scalar_lea.vmem [#allocation6], 304
    %v1655 = vld [vmem:[%s1654] sm:$0xff]
    %1657 = vst [vmem:[#allocation1] ss:$2 sm:$0xff] %v1655
    %v1658 = vld.sshfl [vmem:[#allocation1] sm:$0xff pattern:$0x75316420]
    %v1659 = vld.sshfl [vmem:[#allocation1 + $0x8] sm:$0xff pattern:$0x75316420]
    %1660 = vrot.lane.b32.xlu0 %v1658, 83
    %v1661 = vpop.permute.xlu0 %1660
    %1662 = vrot.lane.b32.xlu0 %v1659, 83
    %v1663 = vpop.permute.xlu0 %1662
    %vm1664 = vcmask 678912
    %v1665 = vsel %vm1664, %v1661, %v1663
    %v1669 = vmul.f32 %v389, %v1661
    %v1670 = vmul.f32 %v385, %v1665
    %v1671 = vmul.f32 %v390, %v1663
    %1675 = vrot.lane.b32.xlu0 %v1669, 45
    %v1676 = vpop.permute.xlu0 %1675
    %1677 = vrot.lane.b32.xlu0 %v1670, 45
    %v1678 = vpop.permute.xlu0 %1677
    %1679 = vrot.lane.b32.xlu0 %v1671, 45
    %v1680 = vpop.permute.xlu0 %1679
    %vm1681 = vcmask 367616
    %v1682 = vsel %vm1681, %v1676, %v1678
    %v1683 = vsel %vm1681, %v1678, %v1680
    %v1686 = vadd.f32 %v1652, %v1682
    %v1687 = vadd.f32 %v1653, %v1683
    %s1688 = scalar_lea.vmem [#allocation6], 312
    %v1689 = vld [vmem:[%s1688] sm:$0xff]
    %1691 = vst [vmem:[#allocation1] ss:$2 sm:$0xff] %v1689
    %v1692 = vld.sshfl [vmem:[#allocation1] sm:$0xff pattern:$0x75316420]
    %v1693 = vld.sshfl [vmem:[#allocation1 + $0x8] sm:$0xff pattern:$0x75316420]
    %1694 = vrot.lane.b32.xlu0 %v1692, 84
    %v1695 = vpop.permute.xlu0 %1694
    %1696 = vrot.lane.b32.xlu0 %v1693, 84
    %v1697 = vpop.permute.xlu0 %1696
    %vm1698 = vcmask 687104
    %v1699 = vsel %vm1698, %v1695, %v1697
    %v1703 = vmul.f32 %v389, %v1695
    %v1704 = vmul.f32 %v385, %v1699
    %v1705 = vmul.f32 %v390, %v1697
    %1709 = vrot.lane.b32.xlu0 %v1703, 44
    %v1710 = vpop.permute.xlu0 %1709
    %1711 = vrot.lane.b32.xlu0 %v1704, 44
    %v1712 = vpop.permute.xlu0 %1711
    %1713 = vrot.lane.b32.xlu0 %v1705, 44
    %v1714 = vpop.permute.xlu0 %1713
    %vm1715 = vcmask 359424
    %v1716 = vsel %vm1715, %v1710, %v1712
    %v1717 = vsel %vm1715, %v1712, %v1714
    %v1720 = vadd.f32 %v1686, %v1716
    %v1721 = vadd.f32 %v1687, %v1717
    %s1722 = scalar_lea.vmem [#allocation6], 320
    %v1723 = vld [vmem:[%s1722] sm:$0xff]
    %1725 = vst [vmem:[#allocation1] ss:$2 sm:$0xff] %v1723
    %v1726 = vld.sshfl [vmem:[#allocation1] sm:$0xff pattern:$0x75316420]
    %v1727 = vld.sshfl [vmem:[#allocation1 + $0x8] sm:$0xff pattern:$0x75316420]
    %1728 = vrot.lane.b32.xlu0 %v1726, 85
    %v1729 = vpop.permute.xlu0 %1728
    %1730 = vrot.lane.b32.xlu0 %v1727, 85
    %v1731 = vpop.permute.xlu0 %1730
    %vm1732 = vcmask 695296
    %v1733 = vsel %vm1732, %v1729, %v1731
    %v1737 = vmul.f32 %v389, %v1729
    %v1738 = vmul.f32 %v385, %v1733
    %v1739 = vmul.f32 %v390, %v1731
    %1743 = vrot.lane.b32.xlu0 %v1737, 43
    %v1744 = vpop.permute.xlu0 %1743
    %1745 = vrot.lane.b32.xlu0 %v1738, 43
    %v1746 = vpop.permute.xlu0 %1745
    %1747 = vrot.lane.b32.xlu0 %v1739, 43
    %v1748 = vpop.permute.xlu0 %1747
    %vm1749 = vcmask 351232
    %v1750 = vsel %vm1749, %v1744, %v1746
    %v1751 = vsel %vm1749, %v1746, %v1748
    %v1754 = vadd.f32 %v1720, %v1750
    %v1755 = vadd.f32 %v1721, %v1751
    %s1756 = scalar_lea.vmem [#allocation6], 328
    %v1757 = vld [vmem:[%s1756] sm:$0xff]
    %1759 = vst [vmem:[#allocation1] ss:$2 sm:$0xff] %v1757
    %v1760 = vld.sshfl [vmem:[#allocation1] sm:$0xff pattern:$0x75316420]
    %v1761 = vld.sshfl [vmem:[#allocation1 + $0x8] sm:$0xff pattern:$0x75316420]
    %1762 = vrot.lane.b32.xlu0 %v1760, 86
    %v1763 = vpop.permute.xlu0 %1762
    %1764 = vrot.lane.b32.xlu0 %v1761, 86
    %v1765 = vpop.permute.xlu0 %1764
    %vm1766 = vcmask 703488
    %v1767 = vsel %vm1766, %v1763, %v1765
    %v1771 = vmul.f32 %v389, %v1763
    %v1772 = vmul.f32 %v385, %v1767
    %v1773 = vmul.f32 %v390, %v1765
    %1777 = vrot.lane.b32.xlu0 %v1771, 42
    %v1778 = vpop.permute.xlu0 %1777
    %1779 = vrot.lane.b32.xlu0 %v1772, 42
    %v1780 = vpop.permute.xlu0 %1779
    %1781 = vrot.lane.b32.xlu0 %v1773, 42
    %v1782 = vpop.permute.xlu0 %1781
    %vm1783 = vcmask 343040
    %v1784 = vsel %vm1783, %v1778, %v1780
    %v1785 = vsel %vm1783, %v1780, %v1782
    %v1788 = vadd.f32 %v1754, %v1784
    %v1789 = vadd.f32 %v1755, %v1785
    %s1790 = scalar_lea.vmem [#allocation6], 336
    %v1791 = vld [vmem:[%s1790] sm:$0xff]
    %1793 = vst [vmem:[#allocation1] ss:$2 sm:$0xff] %v1791
    %v1794 = vld.sshfl [vmem:[#allocation1] sm:$0xff pattern:$0x75316420]
    %v1795 = vld.sshfl [vmem:[#allocation1 + $0x8] sm:$0xff pattern:$0x75316420]
    %1796 = vrot.lane.b32.xlu0 %v1794, 96
    %v1797 = vpop.permute.xlu0 %1796
    %1798 = vrot.lane.b32.xlu0 %v1795, 96
    %v1799 = vpop.permute.xlu0 %1798
    %v1800 = vsel %vm869, %v1797, %v1799
    %v1804 = vmul.f32 %v389, %v1797
    %v1805 = vmul.f32 %v385, %v1800
    %v1806 = vmul.f32 %v390, %v1799
    %1810 = vrot.lane.b32.xlu0 %v1804, 32
    %v1811 = vpop.permute.xlu0 %1810
    %1812 = vrot.lane.b32.xlu0 %v1805, 32
    %v1813 = vpop.permute.xlu0 %1812
    %1814 = vrot.lane.b32.xlu0 %v1806, 32
    %v1815 = vpop.permute.xlu0 %1814
    %v1816 = vsel %vm852, %v1811, %v1813
    %v1817 = vsel %vm852, %v1813, %v1815
    %v1820 = vadd.f32 %v1788, %v1816
    %v1821 = vadd.f32 %v1789, %v1817
    %s1822 = scalar_lea.vmem [#allocation6], 344
    %v1823 = vld [vmem:[%s1822] sm:$0xff]
    %1825 = vst [vmem:[#allocation1] ss:$2 sm:$0xff] %v1823
    %v1826 = vld.sshfl [vmem:[#allocation1] sm:$0xff pattern:$0x75316420]
    %v1827 = vld.sshfl [vmem:[#allocation1 + $0x8] sm:$0xff pattern:$0x75316420]
    %1828 = vrot.lane.b32.xlu0 %v1826, 97
    %v1829 = vpop.permute.xlu0 %1828
    %1830 = vrot.lane.b32.xlu0 %v1827, 97
    %v1831 = vpop.permute.xlu0 %1830
    %vm1832 = vcmask 793600
    %v1833 = vsel %vm1832, %v1829, %v1831
    %v1837 = vmul.f32 %v389, %v1829
    %v1838 = vmul.f32 %v385, %v1833
    %v1839 = vmul.f32 %v390, %v1831
    %1843 = vrot.lane.b32.xlu0 %v1837, 31
    %v1844 = vpop.permute.xlu0 %1843
    %1845 = vrot.lane.b32.xlu0 %v1838, 31
    %v1846 = vpop.permute.xlu0 %1845
    %1847 = vrot.lane.b32.xlu0 %v1839, 31
    %v1848 = vpop.permute.xlu0 %1847
    %vm1849 = vcmask 252928
    %v1850 = vsel %vm1849, %v1844, %v1846
    %v1851 = vsel %vm1849, %v1846, %v1848
    %v1854 = vadd.f32 %v1820, %v1850
    %v1855 = vadd.f32 %v1821, %v1851
    %s1856 = scalar_lea.vmem [#allocation6], 352
    %v1857 = vld [vmem:[%s1856] sm:$0xff]
    %1859 = vst [vmem:[#allocation1] ss:$2 sm:$0xff] %v1857
    %v1860 = vld.sshfl [vmem:[#allocation1] sm:$0xff pattern:$0x75316420]
    %v1861 = vld.sshfl [vmem:[#allocation1 + $0x8] sm:$0xff pattern:$0x75316420]
    %1862 = vrot.lane.b32.xlu0 %v1860, 98
    %v1863 = vpop.permute.xlu0 %1862
    %1864 = vrot.lane.b32.xlu0 %v1861, 98
    %v1865 = vpop.permute.xlu0 %1864
    %vm1866 = vcmask 801792
    %v1867 = vsel %vm1866, %v1863, %v1865
    %v1871 = vmul.f32 %v389, %v1863
    %v1872 = vmul.f32 %v385, %v1867
    %v1873 = vmul.f32 %v390, %v1865
    %1877 = vrot.lane.b32.xlu0 %v1871, 30
    %v1878 = vpop.permute.xlu0 %1877
    %1879 = vrot.lane.b32.xlu0 %v1872, 30
    %v1880 = vpop.permute.xlu0 %1879
    %1881 = vrot.lane.b32.xlu0 %v1873, 30
    %v1882 = vpop.permute.xlu0 %1881
    %vm1883 = vcmask 244736
    %v1884 = vsel %vm1883, %v1878, %v1880
    %v1885 = vsel %vm1883, %v1880, %v1882
    %v1888 = vadd.f32 %v1854, %v1884
    %v1889 = vadd.f32 %v1855, %v1885
    %s1890 = scalar_lea.vmem [#allocation6], 360
    %v1891 = vld [vmem:[%s1890] sm:$0xff]
    %1893 = vst [vmem:[#allocation1] ss:$2 sm:$0xff] %v1891
    %v1894 = vld.sshfl [vmem:[#allocation1] sm:$0xff pattern:$0x75316420]
    %v1895 = vld.sshfl [vmem:[#allocation1 + $0x8] sm:$0xff pattern:$0x75316420]
    %1896 = vrot.lane.b32.xlu0 %v1894, 99
    %v1897 = vpop.permute.xlu0 %1896
    %1898 = vrot.lane.b32.xlu0 %v1895, 99
    %v1899 = vpop.permute.xlu0 %1898
    %vm1900 = vcmask 809984
    %v1901 = vsel %vm1900, %v1897, %v1899
    %v1905 = vmul.f32 %v389, %v1897
    %v1906 = vmul.f32 %v385, %v1901
    %v1907 = vmul.f32 %v390, %v1899
    %1911 = vrot.lane.b32.xlu0 %v1905, 29
    %v1912 = vpop.permute.xlu0 %1911
    %1913 = vrot.lane.b32.xlu0 %v1906, 29
    %v1914 = vpop.permute.xlu0 %1913
    %1915 = vrot.lane.b32.xlu0 %v1907, 29
    %v1916 = vpop.permute.xlu0 %1915
    %vm1917 = vcmask 236544
    %v1918 = vsel %vm1917, %v1912, %v1914
    %v1919 = vsel %vm1917, %v1914, %v1916
    %v1922 = vadd.f32 %v1888, %v1918
    %v1923 = vadd.f32 %v1889, %v1919
    %s1924 = scalar_lea.vmem [#allocation6], 368
    %v1925 = vld [vmem:[%s1924] sm:$0xff]
    %1927 = vst [vmem:[#allocation1] ss:$2 sm:$0xff] %v1925
    %v1928 = vld.sshfl [vmem:[#allocation1] sm:$0xff pattern:$0x75316420]
    %v1929 = vld.sshfl [vmem:[#allocation1 + $0x8] sm:$0xff pattern:$0x75316420]
    %1930 = vrot.lane.b32.xlu0 %v1928, 100
    %v1931 = vpop.permute.xlu0 %1930
    %1932 = vrot.lane.b32.xlu0 %v1929, 100
    %v1933 = vpop.permute.xlu0 %1932
    %vm1934 = vcmask 818176
    %v1935 = vsel %vm1934, %v1931, %v1933
    %v1939 = vmul.f32 %v389, %v1931
    %v1940 = vmul.f32 %v385, %v1935
    %v1941 = vmul.f32 %v390, %v1933
    %1945 = vrot.lane.b32.xlu0 %v1939, 28
    %v1946 = vpop.permute.xlu0 %1945
    %1947 = vrot.lane.b32.xlu0 %v1940, 28
    %v1948 = vpop.permute.xlu0 %1947
    %1949 = vrot.lane.b32.xlu0 %v1941, 28
    %v1950 = vpop.permute.xlu0 %1949
    %vm1951 = vcmask 228352
    %v1952 = vsel %vm1951, %v1946, %v1948
    %v1953 = vsel %vm1951, %v1948, %v1950
    %v1956 = vadd.f32 %v1922, %v1952
    %v1957 = vadd.f32 %v1923, %v1953
    %s1958 = scalar_lea.vmem [#allocation6], 376
    %v1959 = vld [vmem:[%s1958] sm:$0xff]
    %1961 = vst [vmem:[#allocation1] ss:$2 sm:$0xff] %v1959
    %v1962 = vld.sshfl [vmem:[#allocation1] sm:$0xff pattern:$0x75316420]
    %v1963 = vld.sshfl [vmem:[#allocation1 + $0x8] sm:$0xff pattern:$0x75316420]
    %1964 = vrot.lane.b32.xlu0 %v1962, 101
    %v1965 = vpop.permute.xlu0 %1964
    %1966 = vrot.lane.b32.xlu0 %v1963, 101
    %v1967 = vpop.permute.xlu0 %1966
    %vm1968 = vcmask 826368
    %v1969 = vsel %vm1968, %v1965, %v1967
    %v1973 = vmul.f32 %v389, %v1965
    %v1974 = vmul.f32 %v385, %v1969
    %v1975 = vmul.f32 %v390, %v1967
    %1979 = vrot.lane.b32.xlu0 %v1973, 27
    %v1980 = vpop.permute.xlu0 %1979
    %1981 = vrot.lane.b32.xlu0 %v1974, 27
    %v1982 = vpop.permute.xlu0 %1981
    %1983 = vrot.lane.b32.xlu0 %v1975, 27
    %v1984 = vpop.permute.xlu0 %1983
    %vm1985 = vcmask 220160
    %v1986 = vsel %vm1985, %v1980, %v1982
    %v1987 = vsel %vm1985, %v1982, %v1984
    %v1990 = vadd.f32 %v1956, %v1986
    %v1991 = vadd.f32 %v1957, %v1987
    %s1992 = scalar_lea.vmem [#allocation6], 384
    %v1993 = vld [vmem:[%s1992] sm:$0xff]
    %1995 = vst [vmem:[#allocation1] ss:$2 sm:$0xff] %v1993
    %v1996 = vld.sshfl [vmem:[#allocation1] sm:$0xff pattern:$0x75316420]
    %v1997 = vld.sshfl [vmem:[#allocation1 + $0x8] sm:$0xff pattern:$0x75316420]
    %1998 = vrot.lane.b32.xlu0 %v1996, 102
    %v1999 = vpop.permute.xlu0 %1998
    %2000 = vrot.lane.b32.xlu0 %v1997, 102
    %v2001 = vpop.permute.xlu0 %2000
    %vm2002 = vcmask 834560
    %v2003 = vsel %vm2002, %v1999, %v2001
    %v2007 = vmul.f32 %v389, %v1999
    %v2008 = vmul.f32 %v385, %v2003
    %v2009 = vmul.f32 %v390, %v2001
    %2013 = vrot.lane.b32.xlu0 %v2007, 26
    %v2014 = vpop.permute.xlu0 %2013
    %2015 = vrot.lane.b32.xlu0 %v2008, 26
    %v2016 = vpop.permute.xlu0 %2015
    %2017 = vrot.lane.b32.xlu0 %v2009, 26
    %v2018 = vpop.permute.xlu0 %2017
    %vm2019 = vcmask 211968
    %v2020 = vsel %vm2019, %v2014, %v2016
    %v2021 = vsel %vm2019, %v2016, %v2018
    %v2024 = vadd.f32 %v1990, %v2020
    %v2025 = vadd.f32 %v1991, %v2021
    %v2028 = vrot.slane %v2024, 2
    %v2029 = vrot.slane %v2025, 2
    %v2032 = vadd.f32 %v2024, %v2028
    %v2033 = vadd.f32 %v2025, %v2029
    %s2034 = sld [smem:[#allocation8]]
    %v2035 = vstv %s2034
    %v2036 = vmul.f32 %v2032, %v2035
    %v2037 = vmul.f32 %v2033, %v2035
    %s2038 = sld [smem:[#allocation8 + $0x1]]
    %v2039 = vstv %s2038
    %v2040 = vadd.f32 %v2036, %v2039
    %v2041 = vadd.f32 %v2037, %v2039
    %v2042 = vxor.u32 %v2040, 2147483648
    %v2043 = vxor.u32 %v2041, 2147483648
    %v2044 = vmul.f32 %v2042, 1.442695
    %v2045 = vpow.pop %v2044
    %v2046 = vmul.f32 %v2043, 1.442695
    %v2047 = vpow.pop %v2046
    %v2048 = vadd.f32 %v2045, 1.0
    %v2049 = vadd.f32 %v2047, 1.0
    %v2050 = vrcp.pop %v2048
    %v2051 = vmul.f32 %v2048, %v2050
    %v2052 = vsub.f32 1.0, %v2051
    %v2053 = vmul.f32 %v2050, %v2052
    %v2054 = vadd.f32 %v2050, %v2053
    %vm2055 = vweird.f32 %v2048
    %vm2056 = vweird.f32 %v2050
    %vm2057 = vmor %vm2055, %vm2056
    %v2058 = vsel %vm2057, %v2050, %v2054
    %v2059 = vand.u32 2147483647, %v2048
    %vm2060 = vcmp.eq.f32.partialorder %v2059, 8.507059e+37
    %v2061 = vand.u32 %v2048, 2147483648
    %v2062 = vor.u32 1.1754944e-38, %v2061
    %v2063 = vsel %vm2060, %v2062, %v2058
    %v2064 = vmul.f32 1.0, %v2063
    %v2065 = vrcp.pop %v2049
    %v2066 = vmul.f32 %v2049, %v2065
    %v2067 = vsub.f32 1.0, %v2066
    %v2068 = vmul.f32 %v2065, %v2067
    %v2069 = vadd.f32 %v2065, %v2068
    %vm2070 = vweird.f32 %v2049
    %vm2071 = vweird.f32 %v2065
    %vm2072 = vmor %vm2070, %vm2071
    %v2073 = vsel %vm2072, %v2065, %v2069
    %v2074 = vand.u32 2147483647, %v2049
    %vm2075 = vcmp.eq.f32.partialorder %v2074, 8.507059e+37
    %v2076 = vand.u32 %v2049, 2147483648
    %v2077 = vor.u32 1.1754944e-38, %v2076
    %v2078 = vsel %vm2075, %v2077, %v2073
    %v2079 = vmul.f32 1.0, %v2078
    %v2082 = vrot.slane %v2079, 7
    %vm2083 = vcmask 1040384
    %v2084 = vsel %vm2083, %v2064, %v2082
    %v2085 = vsel %vm122, %v2064, %v2082
    %v2086 = vrot.slane %v2085, 1
    %v2087 = vperm.slane %v2084, 0
    %v2088 = vperm.slane %v2084, 1
    %v2089 = vperm.slane %v2086, 0
    %v2090 = vperm.slane %v2086, 1
    %v2095 = vmul.f32 %v292, %v2087
    %v2096 = vmul.f32 %v293, %v2088
    %v2097 = vmul.f32 %v294, %v2087
    %v2098 = vmul.f32 %v295, %v2088
    %v2099 = vmul.f32 %v296, %v2089
    %v2100 = vmul.f32 %v297, %v2090
    %v2101 = vmul.f32 %v298, %v2089
    %v2102 = vmul.f32 %v299, %v2090
    %2103 = vst [vmem:[#allocation9] sm:$0xff] %v2095
    %2104 = vst [vmem:[#allocation9 + $0x8] sm:$0xff] %v2096
    %2105 = vst [vmem:[#allocation9 + $0x10] sm:$0xff] %v2097
    %2106 = vst [vmem:[#allocation9 + $0x18] sm:$0xff] %v2098
    %2107 = vst [vmem:[#allocation9 + $0x20] sm:$0xff] %v2099
    %2108 = vst [vmem:[#allocation9 + $0x28] sm:$0xff] %v2100
    %2109 = vst [vmem:[#allocation9 + $0x30] sm:$0xff] %v2101
    %2110 = vst [vmem:[#allocation9 + $0x38] sm:$0xff] %v2102
    // Predicated region
    $region42: #{tpu_custom_call.1} parent=1 // pred_check
      _
    $region43: #{tpu_custom_call.1} parent=1 // pred_check_branch
      %2112 = sbr.rel (0) target = $region45
    $region44: #{tpu_custom_call.1} parent=1 // pred_region
      %2114 = vsyncadd [#allocation4], 0
      %s2115 = sshll.u32 [#allocation9], 4
      %s2116 = int_to_ptr.vmem [resolvable:$true] %s2115
      %s2117 = sshll.u32 %s7, 4
      %s2118 = int_to_ptr.hbm [resolvable:$true] %s2117
      %2123 = dma.vmem_to_hbm [thread:$0]  %s2116, 1024, %s2118, [#allocation4], 256, 256, 16
    $region45: #{tpu_custom_call.1} parent=1 // pred_fallthru
      _
    // Predicated region
    $region46: #{tpu_custom_call.1} parent=1 // pred_check
      _
    $region47: #{tpu_custom_call.1} parent=1 // pred_check_branch
      %2125 = sbr.rel (0) target = $region49
    $region48: #{tpu_custom_call.1} parent=1 // pred_region
      %2127 = dma.done [#allocation4], 1024
    $region49: #{tpu_custom_call.1} parent=1 // pred_fallthru
      _
    %2128 = vsyncpa [#allocation3], 1
    %2129 = vsyncpa [#allocation7], 1
    %2130 = vsyncpa [#allocation4], 1
    %2131 = vsyncpa [#allocation5], 1

</llo_original>
